<compile_context>
chip_gen: v7x
topology: tpu7x:2x2x1
jax: 0.10.0
libtpu: 0.0.40
codegen_flags: <defaults>
</compile_context>

<pallas_src>
import functools

import jax
import jax.numpy as jnp
from jax import lax
from jax.experimental import pallas as pl
from jax.experimental.pallas import tpu as pltpu

K = 7            # spatial-attention kernel size
PAD = K // 2     # = 3


def cbam_kernel(x_ref, w1_ref, w2_ref, mask_ref, wsa_ref, bsa_ref, out_ref,
                *, H, W, use_mxu):
    # x_ref block: (Bt, C, HW) with HW = H*W lane-dense.
    Bt, C, HW = x_ref.shape
    x = x_ref[...]                                   # (Bt, C, HW) f32

    # ---------------- Channel attention ----------------
    avg_c = jnp.mean(x, axis=2)                      # (Bt, C)  lane reduce
    max_c = jnp.max(x, axis=2)                       # (Bt, C)

    if use_mxu:
        # Large C: MXU path, weights already in standard (K-contract-dim-0)
        # layout -> no in-kernel transpose.  Two separate chains (no concat).
        w1t = w1_ref[...]                            # (C, C//r)
        w2t = w2_ref[...]                            # (C//r, C)

        def _mlp(v):                                 # (Bt, C) -> (Bt, C)
            h = jnp.dot(v, w1t, preferred_element_type=jnp.float32)
            h = jnp.maximum(h, 0.0)
            return jnp.dot(h, w2t, preferred_element_type=jnp.float32)
    else:
        # Tiny C: MXU pipeline latency dominates a CxC//r matvec -> VPU
        # broadcast-multiply + lane reduce (original verified formulation).
        w1 = w1_ref[...]                             # (C//r, C)
        w2 = w2_ref[...]                             # (C, C//r)

        def _mlp(v):                                 # (Bt, C) -> (Bt, C)
            h = jnp.sum(v[:, None, :] * w1[None, :, :], axis=-1)      # (Bt, C//r)
            h = jnp.maximum(h, 0.0)
            return jnp.sum(h[:, None, :] * w2[None, :, :], axis=-1)   # (Bt, C)

    ca = jax.nn.sigmoid(_mlp(avg_c) + _mlp(max_c))   # (Bt, C)
    out1 = x * ca[:, :, None]                        # (Bt, C, HW)

    # ---------------- Spatial attention ----------------
    avg_sp = jnp.mean(out1, axis=1)                  # (Bt, HW)  sublane reduce
    max_sp = jnp.max(out1, axis=1)                   # (Bt, HW)

    # Precomputed boundary masks (f32 {0,1}): rows 0..K-1 are row masks for
    # oy = -PAD..PAD, rows K..2K-1 are col masks for ox = -PAD..PAD.
    row_m = [mask_ref[dy:dy + 1, :] for dy in range(K)]          # (1, HW) each
    col_m = [mask_ref[K + dx:K + dx + 1, :] for dx in range(K)]  # (1, HW) each

    # Hoist all 2*K*K conv weights (scalar SMEM reads) out of the loops.
    w_avg = [[wsa_ref[dy * K + dx] for dx in range(K)] for dy in range(K)]
    w_max = [[wsa_ref[K * K + dy * K + dx] for dx in range(K)] for dy in range(K)]

    # Separable-in-roll-space 7x7 "same" conv over the (avg, max) 2-ch map.
    # Stage 1: ONE row roll per dy (XLU), row mask applied once per plane.
    # roll(a,s)+roll(b,s)=roll(a+b,s) and the row-mask-before-column-roll error
    # cases are exactly the positions the col mask zeroes -> exact.
    ra, rm = [], []
    for dy in range(K):
        oy = dy - PAD
        shift = (-(oy * W)) % HW
        a = avg_sp if shift == 0 else pltpu.roll(avg_sp, shift=shift, axis=1)
        m = max_sp if shift == 0 else pltpu.roll(max_sp, shift=shift, axis=1)
        ra.append(a * row_m[dy])
        rm.append(m * row_m[dy])

    # Stage 2: per dx, weighted dy-sum on the VPU, ONE column roll, col mask.
    conv_terms = []
    for dx in range(K):
        ox = dx - PAD
        s0 = w_avg[0][dx] * ra[0] + w_max[0][dx] * rm[0]
        s1 = w_avg[1][dx] * ra[1] + w_max[1][dx] * rm[1]
        for dy in range(2, K):
            t = w_avg[dy][dx] * ra[dy] + w_max[dy][dx] * rm[dy]
            if dy % 2 == 0:
                s0 = s0 + t
            else:
                s1 = s1 + t
        s = s0 + s1
        shift = (-ox) % HW
        if shift:
            s = pltpu.roll(s, shift=shift, axis=1)
        conv_terms.append(s * col_m[dx])

    conv = conv_terms[0]
    for t in conv_terms[1:]:
        conv = conv + t
    conv = conv + bsa_ref[0]
    sa = jax.nn.sigmoid(conv)                        # (Bt, HW)

    out_ref[...] = (out1 * sa[:, None, :]).astype(out_ref.dtype)


def _pick_block_batch(B, C, HW, itemsize=4, target_bytes=2 << 20, min_steps=2):
    """Batch-block size: ~target_bytes per step, multiple of 8 when possible,
    and >= min_steps grid steps when the batch is large enough (v7x 2 TCs)."""
    per_sample = max(1, C * HW * itemsize)
    bt = max(1, int(target_bytes // per_sample))
    if min_steps > 1 and B >= min_steps * 8:
        bt = min(bt, (B + min_steps - 1) // min_steps)   # keep >= min_steps steps
    bt = min(bt, B)
    if bt >= 8:
        bt = (bt // 8) * 8                               # sublane-aligned blocks
    return max(1, bt)


def cbam_forward(x, w1, w2, wsa, bsa):
    """x: (B, C, H, W) f32. w1: (C//r, C). w2: (C, C//r). wsa: (1,2,K,K). bsa: (1,)."""
    B, C, H, W = x.shape
    HW = H * W
    use_mxu = C >= 128

    x_flat = x.reshape(B, C, HW).astype(jnp.float32)
    wsa_flat = wsa.reshape(-1).astype(jnp.float32)        # (2*K*K,) SMEM scalars
    bsa_arr = bsa.reshape(1).astype(jnp.float32)

    # MLP weights: standard (M,K)x(K,N) layout for the MXU path; original
    # orientation for the tiny-C VPU path.
    if use_mxu:
        w1_in = jnp.asarray(w1.T, dtype=jnp.float32)      # (C, C//r)
        w2_in = jnp.asarray(w2.T, dtype=jnp.float32)      # (C//r, C)
    else:
        w1_in = jnp.asarray(w1, dtype=jnp.float32)        # (C//r, C)
        w2_in = jnp.asarray(w2, dtype=jnp.float32)        # (C, C//r)

    # Precompute "same"-padding boundary masks for the flattened layout.
    pos = jnp.arange(HW, dtype=jnp.int32)
    rows, cols = pos // W, pos % W
    row_masks = jnp.stack(
        [(rows >= -oy) & (rows < H - oy) for oy in range(-PAD, PAD + 1)])
    col_masks = jnp.stack(
        [(cols >= -ox) & (cols < W - ox) for ox in range(-PAD, PAD + 1)])
    masks = jnp.concatenate([row_masks, col_masks], axis=0).astype(jnp.float32)

    Bt = _pick_block_batch(B, C, HW)
    n_steps = (B + Bt - 1) // Bt
    B_pad = n_steps * Bt
    if B_pad != B:
        x_flat = jnp.pad(x_flat, ((0, B_pad - B), (0, 0), (0, 0)))

    # Double-buffered in+out blocks (~4x block) plus ~3 block-sized live f32
    # temporaries, with margin; capped safely below v7x's 64 MiB physical VMEM.
    block_bytes = Bt * C * HW * 4
    vmem_limit = int(min(48 << 20, max(16 << 20, 10 * block_bytes + (2 << 20))))

    kernel = functools.partial(cbam_kernel, H=H, W=W, use_mxu=use_mxu)

    out_flat = pl.pallas_call(
        kernel,
        out_shape=jax.ShapeDtypeStruct((B_pad, C, HW), jnp.float32),
        grid=(n_steps,),
        in_specs=[
            pl.BlockSpec((Bt, C, HW), lambda b: (b, 0, 0)),
            pl.BlockSpec(w1_in.shape, lambda b: (0, 0)),
            pl.BlockSpec(w2_in.shape, lambda b: (0, 0)),
            pl.BlockSpec((2 * K, HW), lambda b: (0, 0)),
            pl.BlockSpec(memory_space=pltpu.MemorySpace.SMEM),   # conv weights
            pl.BlockSpec(memory_space=pltpu.MemorySpace.SMEM),   # conv bias
        ],
        out_specs=pl.BlockSpec((Bt, C, HW), lambda b: (b, 0, 0)),
        compiler_params=pltpu.CompilerParams(
            dimension_semantics=("parallel",),
            vmem_limit_bytes=vmem_limit),
    )(x_flat, w1_in, w2_in, masks, wsa_flat, bsa_arr)

    return out_flat[:B].reshape(B, C, H, W)


def cbam_reference(x, w1, w2, wsa, bsa):
    """Pure-JAX reference mirroring the PyTorch module."""
    avg_c = jnp.mean(x, axis=(2, 3))               # (B, C)
    max_c = jnp.max(x, axis=(2, 3))                # (B, C)

    def mlp(v):                                    # (B, C)
        h = jnp.maximum(v @ w1.T, 0.0)
        return h @ w2.T

    ca = jax.nn.sigmoid(mlp(avg_c) + mlp(max_c))   # (B, C)
    out1 = x * ca[:, :, None, None]

    avg_sp = jnp.mean(out1, axis=1, keepdims=True)
    max_sp = jnp.max(out1, axis=1, keepdims=True)
    sp_in = jnp.concatenate([avg_sp, max_sp], axis=1)          # (B, 2, H, W)
    conv = lax.conv_general_dilated(
        sp_in, wsa, window_strides=(1, 1),
        padding=[(PAD, PAD), (PAD, PAD)],
        dimension_numbers=("NCHW", "OIHW", "NCHW"))
    sa = jax.nn.sigmoid(conv + bsa.reshape(1, 1, 1, 1))        # (B, 1, H, W)
    return out1 * sa


if __name__ == "__main__":
    B, C, H, W = 2, 4, 16, 16
    ratio = 2
    hidden = C // ratio

    key = jax.random.PRNGKey(0)
    kx, k1, k2, k3, k4 = jax.random.split(key, 5)

    x = jax.random.normal(kx, (B, C, H, W), dtype=jnp.float32)
    # shared MLP: Conv2d(C, C//2, 1, bias=False) and Conv2d(C//2, C, 1, bias=False)
    w1 = jax.random.normal(k1, (hidden, C), dtype=jnp.float32) * 0.5
    w2 = jax.random.normal(k2, (C, hidden), dtype=jnp.float32) * 0.5
    # spatial attention: Conv2d(2, 1, 7, padding=3) with bias
    wsa = jax.random.normal(k3, (1, 2, K, K), dtype=jnp.float32) * 0.1
    bsa = jax.random.normal(k4, (1,), dtype=jnp.float32) * 0.1

    out = cbam_forward(x, w1, w2, wsa, bsa)
    out = jax.block_until_ready(out)

    ref = cbam_reference(x, w1, w2, wsa, bsa)
    assert out.shape == (B, C, H, W)
    err = jnp.max(jnp.abs(out - ref))
    assert jnp.allclose(out, ref, atol=1e-4, rtol=1e-4), f"max abs err {err}"

    print("KERNEL_OK")
</pallas_src>

<mosaic_0001>
module attributes {stable_mosaic.version = 11 : i64} {
  func.func @cbam_kernel(%arg0: i32, %arg1: memref<2x4x256xf32, #tpu.memory_space<vmem>>, %arg2: memref<2x4xf32, #tpu.memory_space<vmem>>, %arg3: memref<4x2xf32, #tpu.memory_space<vmem>>, %arg4: memref<14x256xf32, #tpu.memory_space<vmem>>, %arg5: memref<98xf32, #tpu.memory_space<smem>>, %arg6: memref<1xf32, #tpu.memory_space<smem>>, %arg7: memref<2x4x256xf32, #tpu.memory_space<vmem>>) attributes {dimension_semantics = [#tpu.dimension_semantics<parallel>], iteration_bounds = array<i64: 1>, scalar_prefetch = 0 : i64, scratch_operands = 0 : i64, tpu.core_type = #tpu.core_type<tc>, window_params = [{transform_indices = @transform_0, window_bounds = array<i64: 2, 4, 256>}, {pipeline_mode = #tpu.pipeline_mode<synchronous>, transform_indices = @transform_1, window_bounds = array<i64: 2, 4>}, {pipeline_mode = #tpu.pipeline_mode<synchronous>, transform_indices = @transform_2, window_bounds = array<i64: 4, 2>}, {pipeline_mode = #tpu.pipeline_mode<synchronous>, transform_indices = @transform_3, window_bounds = array<i64: 14, 256>}, {transform_indices = @transform_4, window_bounds = array<i64: 98>}, {transform_indices = @transform_5, window_bounds = array<i64: 1>}, {transform_indices = @transform_6, window_bounds = array<i64: 2, 4, 256>}]} {
    %c0 = arith.constant 0 : index
    %c0_0 = arith.constant 0 : index
    %c0_1 = arith.constant 0 : index
    %0 = vector.load %arg1[%c0, %c0_0, %c0_1] : memref<2x4x256xf32, #tpu.memory_space<vmem>>, vector<2x4x256xf32>
    %cst = arith.constant dense<0.000000e+00> : vector<2x4xf32>
    %1 = vector.multi_reduction <add>, %0, %cst [2] : vector<2x4x256xf32> to vector<2x4xf32>
    %cst_2 = arith.constant 2.560000e+02 : f32
    %2 = vector.broadcast %cst_2 : f32 to vector<2x4xf32>
    %3 = arith.divf %1, %2 : vector<2x4xf32>
    %cst_3 = arith.constant dense<0xFF800000> : vector<2x4xf32>
    %4 = vector.multi_reduction <maximumf>, %0, %cst_3 [2] : vector<2x4x256xf32> to vector<2x4xf32>
    %c0_4 = arith.constant 0 : index
    %c0_5 = arith.constant 0 : index
    %5 = vector.load %arg2[%c0_4, %c0_5] : memref<2x4xf32, #tpu.memory_space<vmem>>, vector<2x4xf32>
    %c0_6 = arith.constant 0 : index
    %c0_7 = arith.constant 0 : index
    %6 = vector.load %arg3[%c0_6, %c0_7] : memref<4x2xf32, #tpu.memory_space<vmem>>, vector<4x2xf32>
    %7 = vector.shape_cast %3 : vector<2x4xf32> to vector<2x1x4xf32>
    %8 = vector.shape_cast %5 : vector<2x4xf32> to vector<1x2x4xf32>
    %9 = vector.broadcast %7 : vector<2x1x4xf32> to vector<2x2x4xf32>
    %10 = vector.broadcast %8 : vector<1x2x4xf32> to vector<2x2x4xf32>
    %11 = arith.mulf %9, %10 : vector<2x2x4xf32>
    %cst_8 = arith.constant dense<0.000000e+00> : vector<2x2xf32>
    %12 = vector.multi_reduction <add>, %11, %cst_8 [2] : vector<2x2x4xf32> to vector<2x2xf32>
    %cst_9 = arith.constant 0.000000e+00 : f32
    %13 = vector.broadcast %cst_9 : f32 to vector<2x2xf32>
    %14 = arith.maximumf %12, %13 : vector<2x2xf32>
    %15 = vector.shape_cast %14 : vector<2x2xf32> to vector<2x1x2xf32>
    %16 = vector.shape_cast %6 : vector<4x2xf32> to vector<1x4x2xf32>
    %17 = vector.broadcast %15 : vector<2x1x2xf32> to vector<2x4x2xf32>
    %18 = vector.broadcast %16 : vector<1x4x2xf32> to vector<2x4x2xf32>
    %19 = arith.mulf %17, %18 : vector<2x4x2xf32>
    %cst_10 = arith.constant dense<0.000000e+00> : vector<2x4xf32>
    %20 = vector.multi_reduction <add>, %19, %cst_10 [2] : vector<2x4x2xf32> to vector<2x4xf32>
    %21 = vector.shape_cast %4 : vector<2x4xf32> to vector<2x1x4xf32>
    %22 = vector.shape_cast %5 : vector<2x4xf32> to vector<1x2x4xf32>
    %23 = vector.broadcast %21 : vector<2x1x4xf32> to vector<2x2x4xf32>
    %24 = vector.broadcast %22 : vector<1x2x4xf32> to vector<2x2x4xf32>
    %25 = arith.mulf %23, %24 : vector<2x2x4xf32>
    %cst_11 = arith.constant dense<0.000000e+00> : vector<2x2xf32>
    %26 = vector.multi_reduction <add>, %25, %cst_11 [2] : vector<2x2x4xf32> to vector<2x2xf32>
    %cst_12 = arith.constant 0.000000e+00 : f32
    %27 = vector.broadcast %cst_12 : f32 to vector<2x2xf32>
    %28 = arith.maximumf %26, %27 : vector<2x2xf32>
    %29 = vector.shape_cast %28 : vector<2x2xf32> to vector<2x1x2xf32>
    %30 = vector.shape_cast %6 : vector<4x2xf32> to vector<1x4x2xf32>
    %31 = vector.broadcast %29 : vector<2x1x2xf32> to vector<2x4x2xf32>
    %32 = vector.broadcast %30 : vector<1x4x2xf32> to vector<2x4x2xf32>
    %33 = arith.mulf %31, %32 : vector<2x4x2xf32>
    %cst_13 = arith.constant dense<0.000000e+00> : vector<2x4xf32>
    %34 = vector.multi_reduction <add>, %33, %cst_13 [2] : vector<2x4x2xf32> to vector<2x4xf32>
    %35 = arith.addf %20, %34 : vector<2x4xf32>
    %36 = arith.negf %35 : vector<2x4xf32>
    %37 = math.exp %36 : vector<2x4xf32>
    %cst_14 = arith.constant 1.000000e+00 : f32
    %38 = vector.broadcast %cst_14 : f32 to vector<2x4xf32>
    %39 = arith.addf %38, %37 : vector<2x4xf32>
    %40 = arith.divf %38, %39 : vector<2x4xf32>
    %41 = vector.shape_cast %40 : vector<2x4xf32> to vector<2x4x1xf32>
    %42 = vector.broadcast %41 : vector<2x4x1xf32> to vector<2x4x256xf32>
    %43 = arith.mulf %0, %42 : vector<2x4x256xf32>
    %cst_15 = arith.constant dense<0.000000e+00> : vector<2x256xf32>
    %44 = vector.multi_reduction <add>, %43, %cst_15 [1] : vector<2x4x256xf32> to vector<2x256xf32>
    %cst_16 = arith.constant 4.000000e+00 : f32
    %45 = vector.broadcast %cst_16 : f32 to vector<2x256xf32>
    %46 = arith.divf %44, %45 : vector<2x256xf32>
    %cst_17 = arith.constant dense<0xFF800000> : vector<2x256xf32>
    %47 = vector.multi_reduction <maximumf>, %43, %cst_17 [1] : vector<2x4x256xf32> to vector<2x256xf32>
    %c0_18 = arith.constant 0 : index
    %c0_19 = arith.constant 0 : index
    %48 = vector.load %arg4[%c0_18, %c0_19] : memref<14x256xf32, #tpu.memory_space<vmem>>, vector<1x256xf32>
    %c1 = arith.constant 1 : index
    %c0_20 = arith.constant 0 : index
    %49 = vector.load %arg4[%c1, %c0_20] : memref<14x256xf32, #tpu.memory_space<vmem>>, vector<1x256xf32>
    %c2 = arith.constant 2 : index
    %c0_21 = arith.constant 0 : index
    %50 = vector.load %arg4[%c2, %c0_21] : memref<14x256xf32, #tpu.memory_space<vmem>>, vector<1x256xf32>
    %c3 = arith.constant 3 : index
    %c0_22 = arith.constant 0 : index
    %51 = vector.load %arg4[%c3, %c0_22] : memref<14x256xf32, #tpu.memory_space<vmem>>, vector<1x256xf32>
    %c4 = arith.constant 4 : index
    %c0_23 = arith.constant 0 : index
    %52 = vector.load %arg4[%c4, %c0_23] : memref<14x256xf32, #tpu.memory_space<vmem>>, vector<1x256xf32>
    %c5 = arith.constant 5 : index
    %c0_24 = arith.constant 0 : index
    %53 = vector.load %arg4[%c5, %c0_24] : memref<14x256xf32, #tpu.memory_space<vmem>>, vector<1x256xf32>
    %c6 = arith.constant 6 : index
    %c0_25 = arith.constant 0 : index
    %54 = vector.load %arg4[%c6, %c0_25] : memref<14x256xf32, #tpu.memory_space<vmem>>, vector<1x256xf32>
    %c7 = arith.constant 7 : index
    %c0_26 = arith.constant 0 : index
    %55 = vector.load %arg4[%c7, %c0_26] : memref<14x256xf32, #tpu.memory_space<vmem>>, vector<1x256xf32>
    %c8 = arith.constant 8 : index
    %c0_27 = arith.constant 0 : index
    %56 = vector.load %arg4[%c8, %c0_27] : memref<14x256xf32, #tpu.memory_space<vmem>>, vector<1x256xf32>
    %c9 = arith.constant 9 : index
    %c0_28 = arith.constant 0 : index
    %57 = vector.load %arg4[%c9, %c0_28] : memref<14x256xf32, #tpu.memory_space<vmem>>, vector<1x256xf32>
    %c10 = arith.constant 10 : index
    %c0_29 = arith.constant 0 : index
    %58 = vector.load %arg4[%c10, %c0_29] : memref<14x256xf32, #tpu.memory_space<vmem>>, vector<1x256xf32>
    %c11 = arith.constant 11 : index
    %c0_30 = arith.constant 0 : index
    %59 = vector.load %arg4[%c11, %c0_30] : memref<14x256xf32, #tpu.memory_space<vmem>>, vector<1x256xf32>
    %c12 = arith.constant 12 : index
    %c0_31 = arith.constant 0 : index
    %60 = vector.load %arg4[%c12, %c0_31] : memref<14x256xf32, #tpu.memory_space<vmem>>, vector<1x256xf32>
    %c13 = arith.constant 13 : index
    %c0_32 = arith.constant 0 : index
    %61 = vector.load %arg4[%c13, %c0_32] : memref<14x256xf32, #tpu.memory_space<vmem>>, vector<1x256xf32>
    %c0_33 = arith.constant 0 : index
    %62 = memref.load %arg5[%c0_33] : memref<98xf32, #tpu.memory_space<smem>>
    %c1_34 = arith.constant 1 : index
    %63 = memref.load %arg5[%c1_34] : memref<98xf32, #tpu.memory_space<smem>>
    %c2_35 = arith.constant 2 : index
    %64 = memref.load %arg5[%c2_35] : memref<98xf32, #tpu.memory_space<smem>>
    %c3_36 = arith.constant 3 : index
    %65 = memref.load %arg5[%c3_36] : memref<98xf32, #tpu.memory_space<smem>>
    %c4_37 = arith.constant 4 : index
    %66 = memref.load %arg5[%c4_37] : memref<98xf32, #tpu.memory_space<smem>>
    %c5_38 = arith.constant 5 : index
    %67 = memref.load %arg5[%c5_38] : memref<98xf32, #tpu.memory_space<smem>>
    %c6_39 = arith.constant 6 : index
    %68 = memref.load %arg5[%c6_39] : memref<98xf32, #tpu.memory_space<smem>>
    %c7_40 = arith.constant 7 : index
    %69 = memref.load %arg5[%c7_40] : memref<98xf32, #tpu.memory_space<smem>>
    %c8_41 = arith.constant 8 : index
    %70 = memref.load %arg5[%c8_41] : memref<98xf32, #tpu.memory_space<smem>>
    %c9_42 = arith.constant 9 : index
    %71 = memref.load %arg5[%c9_42] : memref<98xf32, #tpu.memory_space<smem>>
    %c10_43 = arith.constant 10 : index
    %72 = memref.load %arg5[%c10_43] : memref<98xf32, #tpu.memory_space<smem>>
    %c11_44 = arith.constant 11 : index
    %73 = memref.load %arg5[%c11_44] : memref<98xf32, #tpu.memory_space<smem>>
    %c12_45 = arith.constant 12 : index
    %74 = memref.load %arg5[%c12_45] : memref<98xf32, #tpu.memory_space<smem>>
    %c13_46 = arith.constant 13 : index
    %75 = memref.load %arg5[%c13_46] : memref<98xf32, #tpu.memory_space<smem>>
    %c14 = arith.constant 14 : index
    %76 = memref.load %arg5[%c14] : memref<98xf32, #tpu.memory_space<smem>>
    %c15 = arith.constant 15 : index
    %77 = memref.load %arg5[%c15] : memref<98xf32, #tpu.memory_space<smem>>
    %c16 = arith.constant 16 : index
    %78 = memref.load %arg5[%c16] : memref<98xf32, #tpu.memory_space<smem>>
    %c17 = arith.constant 17 : index
    %79 = memref.load %arg5[%c17] : memref<98xf32, #tpu.memory_space<smem>>
    %c18 = arith.constant 18 : index
    %80 = memref.load %arg5[%c18] : memref<98xf32, #tpu.memory_space<smem>>
    %c19 = arith.constant 19 : index
    %81 = memref.load %arg5[%c19] : memref<98xf32, #tpu.memory_space<smem>>
    %c20 = arith.constant 20 : index
    %82 = memref.load %arg5[%c20] : memref<98xf32, #tpu.memory_space<smem>>
    %c21 = arith.constant 21 : index
    %83 = memref.load %arg5[%c21] : memref<98xf32, #tpu.memory_space<smem>>
    %c22 = arith.constant 22 : index
    %84 = memref.load %arg5[%c22] : memref<98xf32, #tpu.memory_space<smem>>
    %c23 = arith.constant 23 : index
    %85 = memref.load %arg5[%c23] : memref<98xf32, #tpu.memory_space<smem>>
    %c24 = arith.constant 24 : index
    %86 = memref.load %arg5[%c24] : memref<98xf32, #tpu.memory_space<smem>>
    %c25 = arith.constant 25 : index
    %87 = memref.load %arg5[%c25] : memref<98xf32, #tpu.memory_space<smem>>
    %c26 = arith.constant 26 : index
    %88 = memref.load %arg5[%c26] : memref<98xf32, #tpu.memory_space<smem>>
    %c27 = arith.constant 27 : index
    %89 = memref.load %arg5[%c27] : memref<98xf32, #tpu.memory_space<smem>>
    %c28 = arith.constant 28 : index
    %90 = memref.load %arg5[%c28] : memref<98xf32, #tpu.memory_space<smem>>
    %c29 = arith.constant 29 : index
    %91 = memref.load %arg5[%c29] : memref<98xf32, #tpu.memory_space<smem>>
    %c30 = arith.constant 30 : index
    %92 = memref.load %arg5[%c30] : memref<98xf32, #tpu.memory_space<smem>>
    %c31 = arith.constant 31 : index
    %93 = memref.load %arg5[%c31] : memref<98xf32, #tpu.memory_space<smem>>
    %c32 = arith.constant 32 : index
    %94 = memref.load %arg5[%c32] : memref<98xf32, #tpu.memory_space<smem>>
    %c33 = arith.constant 33 : index
    %95 = memref.load %arg5[%c33] : memref<98xf32, #tpu.memory_space<smem>>
    %c34 = arith.constant 34 : index
    %96 = memref.load %arg5[%c34] : memref<98xf32, #tpu.memory_space<smem>>
    %c35 = arith.constant 35 : index
    %97 = memref.load %arg5[%c35] : memref<98xf32, #tpu.memory_space<smem>>
    %c36 = arith.constant 36 : index
    %98 = memref.load %arg5[%c36] : memref<98xf32, #tpu.memory_space<smem>>
    %c37 = arith.constant 37 : index
    %99 = memref.load %arg5[%c37] : memref<98xf32, #tpu.memory_space<smem>>
    %c38 = arith.constant 38 : index
    %100 = memref.load %arg5[%c38] : memref<98xf32, #tpu.memory_space<smem>>
    %c39 = arith.constant 39 : index
    %101 = memref.load %arg5[%c39] : memref<98xf32, #tpu.memory_space<smem>>
    %c40 = arith.constant 40 : index
    %102 = memref.load %arg5[%c40] : memref<98xf32, #tpu.memory_space<smem>>
    %c41 = arith.constant 41 : index
    %103 = memref.load %arg5[%c41] : memref<98xf32, #tpu.memory_space<smem>>
    %c42 = arith.constant 42 : index
    %104 = memref.load %arg5[%c42] : memref<98xf32, #tpu.memory_space<smem>>
    %c43 = arith.constant 43 : index
    %105 = memref.load %arg5[%c43] : memref<98xf32, #tpu.memory_space<smem>>
    %c44 = arith.constant 44 : index
    %106 = memref.load %arg5[%c44] : memref<98xf32, #tpu.memory_space<smem>>
    %c45 = arith.constant 45 : index
    %107 = memref.load %arg5[%c45] : memref<98xf32, #tpu.memory_space<smem>>
    %c46 = arith.constant 46 : index
    %108 = memref.load %arg5[%c46] : memref<98xf32, #tpu.memory_space<smem>>
    %c47 = arith.constant 47 : index
    %109 = memref.load %arg5[%c47] : memref<98xf32, #tpu.memory_space<smem>>
    %c48 = arith.constant 48 : index
    %110 = memref.load %arg5[%c48] : memref<98xf32, #tpu.memory_space<smem>>
    %c49 = arith.constant 49 : index
    %111 = memref.load %arg5[%c49] : memref<98xf32, #tpu.memory_space<smem>>
    %c50 = arith.constant 50 : index
    %112 = memref.load %arg5[%c50] : memref<98xf32, #tpu.memory_space<smem>>
    %c51 = arith.constant 51 : index
    %113 = memref.load %arg5[%c51] : memref<98xf32, #tpu.memory_space<smem>>
    %c52 = arith.constant 52 : index
    %114 = memref.load %arg5[%c52] : memref<98xf32, #tpu.memory_space<smem>>
    %c53 = arith.constant 53 : index
    %115 = memref.load %arg5[%c53] : memref<98xf32, #tpu.memory_space<smem>>
    %c54 = arith.constant 54 : index
    %116 = memref.load %arg5[%c54] : memref<98xf32, #tpu.memory_space<smem>>
    %c55 = arith.constant 55 : index
    %117 = memref.load %arg5[%c55] : memref<98xf32, #tpu.memory_space<smem>>
    %c56 = arith.constant 56 : index
    %118 = memref.load %arg5[%c56] : memref<98xf32, #tpu.memory_space<smem>>
    %c57 = arith.constant 57 : index
    %119 = memref.load %arg5[%c57] : memref<98xf32, #tpu.memory_space<smem>>
    %c58 = arith.constant 58 : index
    %120 = memref.load %arg5[%c58] : memref<98xf32, #tpu.memory_space<smem>>
    %c59 = arith.constant 59 : index
    %121 = memref.load %arg5[%c59] : memref<98xf32, #tpu.memory_space<smem>>
    %c60 = arith.constant 60 : index
    %122 = memref.load %arg5[%c60] : memref<98xf32, #tpu.memory_space<smem>>
    %c61 = arith.constant 61 : index
    %123 = memref.load %arg5[%c61] : memref<98xf32, #tpu.memory_space<smem>>
    %c62 = arith.constant 62 : index
    %124 = memref.load %arg5[%c62] : memref<98xf32, #tpu.memory_space<smem>>
    %c63 = arith.constant 63 : index
    %125 = memref.load %arg5[%c63] : memref<98xf32, #tpu.memory_space<smem>>
    %c64 = arith.constant 64 : index
    %126 = memref.load %arg5[%c64] : memref<98xf32, #tpu.memory_space<smem>>
    %c65 = arith.constant 65 : index
    %127 = memref.load %arg5[%c65] : memref<98xf32, #tpu.memory_space<smem>>
    %c66 = arith.constant 66 : index
    %128 = memref.load %arg5[%c66] : memref<98xf32, #tpu.memory_space<smem>>
    %c67 = arith.constant 67 : index
    %129 = memref.load %arg5[%c67] : memref<98xf32, #tpu.memory_space<smem>>
    %c68 = arith.constant 68 : index
    %130 = memref.load %arg5[%c68] : memref<98xf32, #tpu.memory_space<smem>>
    %c69 = arith.constant 69 : index
    %131 = memref.load %arg5[%c69] : memref<98xf32, #tpu.memory_space<smem>>
    %c70 = arith.constant 70 : index
    %132 = memref.load %arg5[%c70] : memref<98xf32, #tpu.memory_space<smem>>
    %c71 = arith.constant 71 : index
    %133 = memref.load %arg5[%c71] : memref<98xf32, #tpu.memory_space<smem>>
    %c72 = arith.constant 72 : index
    %134 = memref.load %arg5[%c72] : memref<98xf32, #tpu.memory_space<smem>>
    %c73 = arith.constant 73 : index
    %135 = memref.load %arg5[%c73] : memref<98xf32, #tpu.memory_space<smem>>
    %c74 = arith.constant 74 : index
    %136 = memref.load %arg5[%c74] : memref<98xf32, #tpu.memory_space<smem>>
    %c75 = arith.constant 75 : index
    %137 = memref.load %arg5[%c75] : memref<98xf32, #tpu.memory_space<smem>>
    %c76 = arith.constant 76 : index
    %138 = memref.load %arg5[%c76] : memref<98xf32, #tpu.memory_space<smem>>
    %c77 = arith.constant 77 : index
    %139 = memref.load %arg5[%c77] : memref<98xf32, #tpu.memory_space<smem>>
    %c78 = arith.constant 78 : index
    %140 = memref.load %arg5[%c78] : memref<98xf32, #tpu.memory_space<smem>>
    %c79 = arith.constant 79 : index
    %141 = memref.load %arg5[%c79] : memref<98xf32, #tpu.memory_space<smem>>
    %c80 = arith.constant 80 : index
    %142 = memref.load %arg5[%c80] : memref<98xf32, #tpu.memory_space<smem>>
    %c81 = arith.constant 81 : index
    %143 = memref.load %arg5[%c81] : memref<98xf32, #tpu.memory_space<smem>>
    %c82 = arith.constant 82 : index
    %144 = memref.load %arg5[%c82] : memref<98xf32, #tpu.memory_space<smem>>
    %c83 = arith.constant 83 : index
    %145 = memref.load %arg5[%c83] : memref<98xf32, #tpu.memory_space<smem>>
    %c84 = arith.constant 84 : index
    %146 = memref.load %arg5[%c84] : memref<98xf32, #tpu.memory_space<smem>>
    %c85 = arith.constant 85 : index
    %147 = memref.load %arg5[%c85] : memref<98xf32, #tpu.memory_space<smem>>
    %c86 = arith.constant 86 : index
    %148 = memref.load %arg5[%c86] : memref<98xf32, #tpu.memory_space<smem>>
    %c87 = arith.constant 87 : index
    %149 = memref.load %arg5[%c87] : memref<98xf32, #tpu.memory_space<smem>>
    %c88 = arith.constant 88 : index
    %150 = memref.load %arg5[%c88] : memref<98xf32, #tpu.memory_space<smem>>
    %c89 = arith.constant 89 : index
    %151 = memref.load %arg5[%c89] : memref<98xf32, #tpu.memory_space<smem>>
    %c90 = arith.constant 90 : index
    %152 = memref.load %arg5[%c90] : memref<98xf32, #tpu.memory_space<smem>>
    %c91 = arith.constant 91 : index
    %153 = memref.load %arg5[%c91] : memref<98xf32, #tpu.memory_space<smem>>
    %c92 = arith.constant 92 : index
    %154 = memref.load %arg5[%c92] : memref<98xf32, #tpu.memory_space<smem>>
    %c93 = arith.constant 93 : index
    %155 = memref.load %arg5[%c93] : memref<98xf32, #tpu.memory_space<smem>>
    %c94 = arith.constant 94 : index
    %156 = memref.load %arg5[%c94] : memref<98xf32, #tpu.memory_space<smem>>
    %c95 = arith.constant 95 : index
    %157 = memref.load %arg5[%c95] : memref<98xf32, #tpu.memory_space<smem>>
    %c96 = arith.constant 96 : index
    %158 = memref.load %arg5[%c96] : memref<98xf32, #tpu.memory_space<smem>>
    %c97 = arith.constant 97 : index
    %159 = memref.load %arg5[%c97] : memref<98xf32, #tpu.memory_space<smem>>
    %c48_i32 = arith.constant 48 : i32
    %160 = tpu.dynamic_rotate %46 by %c48_i32 dim 1 : vector<2x256xf32>, i32 -> vector<2x256xf32>
    %c48_i32_47 = arith.constant 48 : i32
    %161 = tpu.dynamic_rotate %47 by %c48_i32_47 dim 1 : vector<2x256xf32>, i32 -> vector<2x256xf32>
    %162 = vector.broadcast %48 : vector<1x256xf32> to vector<2x256xf32>
    %163 = arith.mulf %160, %162 : vector<2x256xf32>
    %164 = vector.broadcast %48 : vector<1x256xf32> to vector<2x256xf32>
    %165 = arith.mulf %161, %164 : vector<2x256xf32>
    %c32_i32 = arith.constant 32 : i32
    %166 = tpu.dynamic_rotate %46 by %c32_i32 dim 1 : vector<2x256xf32>, i32 -> vector<2x256xf32>
    %c32_i32_48 = arith.constant 32 : i32
    %167 = tpu.dynamic_rotate %47 by %c32_i32_48 dim 1 : vector<2x256xf32>, i32 -> vector<2x256xf32>
    %168 = vector.broadcast %49 : vector<1x256xf32> to vector<2x256xf32>
    %169 = arith.mulf %166, %168 : vector<2x256xf32>
    %170 = vector.broadcast %49 : vector<1x256xf32> to vector<2x256xf32>
    %171 = arith.mulf %167, %170 : vector<2x256xf32>
    %c16_i32 = arith.constant 16 : i32
    %172 = tpu.dynamic_rotate %46 by %c16_i32 dim 1 : vector<2x256xf32>, i32 -> vector<2x256xf32>
    %c16_i32_49 = arith.constant 16 : i32
    %173 = tpu.dynamic_rotate %47 by %c16_i32_49 dim 1 : vector<2x256xf32>, i32 -> vector<2x256xf32>
    %174 = vector.broadcast %50 : vector<1x256xf32> to vector<2x256xf32>
    %175 = arith.mulf %172, %174 : vector<2x256xf32>
    %176 = vector.broadcast %50 : vector<1x256xf32> to vector<2x256xf32>
    %177 = arith.mulf %173, %176 : vector<2x256xf32>
    %178 = vector.broadcast %51 : vector<1x256xf32> to vector<2x256xf32>
    %179 = arith.mulf %46, %178 : vector<2x256xf32>
    %180 = vector.broadcast %51 : vector<1x256xf32> to vector<2x256xf32>
    %181 = arith.mulf %47, %180 : vector<2x256xf32>
    %c240_i32 = arith.constant 240 : i32
    %182 = tpu.dynamic_rotate %46 by %c240_i32 dim 1 : vector<2x256xf32>, i32 -> vector<2x256xf32>
    %c240_i32_50 = arith.constant 240 : i32
    %183 = tpu.dynamic_rotate %47 by %c240_i32_50 dim 1 : vector<2x256xf32>, i32 -> vector<2x256xf32>
    %184 = vector.broadcast %52 : vector<1x256xf32> to vector<2x256xf32>
    %185 = arith.mulf %182, %184 : vector<2x256xf32>
    %186 = vector.broadcast %52 : vector<1x256xf32> to vector<2x256xf32>
    %187 = arith.mulf %183, %186 : vector<2x256xf32>
    %c224_i32 = arith.constant 224 : i32
    %188 = tpu.dynamic_rotate %46 by %c224_i32 dim 1 : vector<2x256xf32>, i32 -> vector<2x256xf32>
    %c224_i32_51 = arith.constant 224 : i32
    %189 = tpu.dynamic_rotate %47 by %c224_i32_51 dim 1 : vector<2x256xf32>, i32 -> vector<2x256xf32>
    %190 = vector.broadcast %53 : vector<1x256xf32> to vector<2x256xf32>
    %191 = arith.mulf %188, %190 : vector<2x256xf32>
    %192 = vector.broadcast %53 : vector<1x256xf32> to vector<2x256xf32>
    %193 = arith.mulf %189, %192 : vector<2x256xf32>
    %c208_i32 = arith.constant 208 : i32
    %194 = tpu.dynamic_rotate %46 by %c208_i32 dim 1 : vector<2x256xf32>, i32 -> vector<2x256xf32>
    %c208_i32_52 = arith.constant 208 : i32
    %195 = tpu.dynamic_rotate %47 by %c208_i32_52 dim 1 : vector<2x256xf32>, i32 -> vector<2x256xf32>
    %196 = vector.broadcast %54 : vector<1x256xf32> to vector<2x256xf32>
    %197 = arith.mulf %194, %196 : vector<2x256xf32>
    %198 = vector.broadcast %54 : vector<1x256xf32> to vector<2x256xf32>
    %199 = arith.mulf %195, %198 : vector<2x256xf32>
    %200 = vector.broadcast %62 : f32 to vector<2x256xf32>
    %201 = arith.mulf %200, %163 : vector<2x256xf32>
    %202 = vector.broadcast %111 : f32 to vector<2x256xf32>
    %203 = arith.mulf %202, %165 : vector<2x256xf32>
    %204 = arith.addf %201, %203 : vector<2x256xf32>
    %205 = vector.broadcast %69 : f32 to vector<2x256xf32>
    %206 = arith.mulf %205, %169 : vector<2x256xf32>
    %207 = vector.broadcast %118 : f32 to vector<2x256xf32>
    %208 = arith.mulf %207, %171 : vector<2x256xf32>
    %209 = arith.addf %206, %208 : vector<2x256xf32>
    %210 = vector.broadcast %76 : f32 to vector<2x256xf32>
    %211 = arith.mulf %210, %175 : vector<2x256xf32>
    %212 = vector.broadcast %125 : f32 to vector<2x256xf32>
    %213 = arith.mulf %212, %177 : vector<2x256xf32>
    %214 = arith.addf %211, %213 : vector<2x256xf32>
    %215 = arith.addf %204, %214 : vector<2x256xf32>
    %216 = vector.broadcast %83 : f32 to vector<2x256xf32>
    %217 = arith.mulf %216, %179 : vector<2x256xf32>
    %218 = vector.broadcast %132 : f32 to vector<2x256xf32>
    %219 = arith.mulf %218, %181 : vector<2x256xf32>
    %220 = arith.addf %217, %219 : vector<2x256xf32>
    %221 = arith.addf %209, %220 : vector<2x256xf32>
    %222 = vector.broadcast %90 : f32 to vector<2x256xf32>
    %223 = arith.mulf %222, %185 : vector<2x256xf32>
    %224 = vector.broadcast %139 : f32 to vector<2x256xf32>
    %225 = arith.mulf %224, %187 : vector<2x256xf32>
    %226 = arith.addf %223, %225 : vector<2x256xf32>
    %227 = arith.addf %215, %226 : vector<2x256xf32>
    %228 = vector.broadcast %97 : f32 to vector<2x256xf32>
    %229 = arith.mulf %228, %191 : vector<2x256xf32>
    %230 = vector.broadcast %146 : f32 to vector<2x256xf32>
    %231 = arith.mulf %230, %193 : vector<2x256xf32>
    %232 = arith.addf %229, %231 : vector<2x256xf32>
    %233 = arith.addf %221, %232 : vector<2x256xf32>
    %234 = vector.broadcast %104 : f32 to vector<2x256xf32>
    %235 = arith.mulf %234, %197 : vector<2x256xf32>
    %236 = vector.broadcast %153 : f32 to vector<2x256xf32>
    %237 = arith.mulf %236, %199 : vector<2x256xf32>
    %238 = arith.addf %235, %237 : vector<2x256xf32>
    %239 = arith.addf %227, %238 : vector<2x256xf32>
    %240 = arith.addf %239, %233 : vector<2x256xf32>
    %c3_i32 = arith.constant 3 : i32
    %241 = tpu.dynamic_rotate %240 by %c3_i32 dim 1 : vector<2x256xf32>, i32 -> vector<2x256xf32>
    %242 = vector.broadcast %55 : vector<1x256xf32> to vector<2x256xf32>
    %243 = arith.mulf %241, %242 : vector<2x256xf32>
    %244 = vector.broadcast %63 : f32 to vector<2x256xf32>
    %245 = arith.mulf %244, %163 : vector<2x256xf32>
    %246 = vector.broadcast %112 : f32 to vector<2x256xf32>
    %247 = arith.mulf %246, %165 : vector<2x256xf32>
    %248 = arith.addf %245, %247 : vector<2x256xf32>
    %249 = vector.broadcast %70 : f32 to vector<2x256xf32>
    %250 = arith.mulf %249, %169 : vector<2x256xf32>
    %251 = vector.broadcast %119 : f32 to vector<2x256xf32>
    %252 = arith.mulf %251, %171 : vector<2x256xf32>
    %253 = arith.addf %250, %252 : vector<2x256xf32>
    %254 = vector.broadcast %77 : f32 to vector<2x256xf32>
    %255 = arith.mulf %254, %175 : vector<2x256xf32>
    %256 = vector.broadcast %126 : f32 to vector<2x256xf32>
    %257 = arith.mulf %256, %177 : vector<2x256xf32>
    %258 = arith.addf %255, %257 : vector<2x256xf32>
    %259 = arith.addf %248, %258 : vector<2x256xf32>
    %260 = vector.broadcast %84 : f32 to vector<2x256xf32>
    %261 = arith.mulf %260, %179 : vector<2x256xf32>
    %262 = vector.broadcast %133 : f32 to vector<2x256xf32>
    %263 = arith.mulf %262, %181 : vector<2x256xf32>
    %264 = arith.addf %261, %263 : vector<2x256xf32>
    %265 = arith.addf %253, %264 : vector<2x256xf32>
    %266 = vector.broadcast %91 : f32 to vector<2x256xf32>
    %267 = arith.mulf %266, %185 : vector<2x256xf32>
    %268 = vector.broadcast %140 : f32 to vector<2x256xf32>
    %269 = arith.mulf %268, %187 : vector<2x256xf32>
    %270 = arith.addf %267, %269 : vector<2x256xf32>
    %271 = arith.addf %259, %270 : vector<2x256xf32>
    %272 = vector.broadcast %98 : f32 to vector<2x256xf32>
    %273 = arith.mulf %272, %191 : vector<2x256xf32>
    %274 = vector.broadcast %147 : f32 to vector<2x256xf32>
    %275 = arith.mulf %274, %193 : vector<2x256xf32>
    %276 = arith.addf %273, %275 : vector<2x256xf32>
    %277 = arith.addf %265, %276 : vector<2x256xf32>
    %278 = vector.broadcast %105 : f32 to vector<2x256xf32>
    %279 = arith.mulf %278, %197 : vector<2x256xf32>
    %280 = vector.broadcast %154 : f32 to vector<2x256xf32>
    %281 = arith.mulf %280, %199 : vector<2x256xf32>
    %282 = arith.addf %279, %281 : vector<2x256xf32>
    %283 = arith.addf %271, %282 : vector<2x256xf32>
    %284 = arith.addf %283, %277 : vector<2x256xf32>
    %c2_i32 = arith.constant 2 : i32
    %285 = tpu.dynamic_rotate %284 by %c2_i32 dim 1 : vector<2x256xf32>, i32 -> vector<2x256xf32>
    %286 = vector.broadcast %56 : vector<1x256xf32> to vector<2x256xf32>
    %287 = arith.mulf %285, %286 : vector<2x256xf32>
    %288 = vector.broadcast %64 : f32 to vector<2x256xf32>
    %289 = arith.mulf %288, %163 : vector<2x256xf32>
    %290 = vector.broadcast %113 : f32 to vector<2x256xf32>
    %291 = arith.mulf %290, %165 : vector<2x256xf32>
    %292 = arith.addf %289, %291 : vector<2x256xf32>
    %293 = vector.broadcast %71 : f32 to vector<2x256xf32>
    %294 = arith.mulf %293, %169 : vector<2x256xf32>
    %295 = vector.broadcast %120 : f32 to vector<2x256xf32>
    %296 = arith.mulf %295, %171 : vector<2x256xf32>
    %297 = arith.addf %294, %296 : vector<2x256xf32>
    %298 = vector.broadcast %78 : f32 to vector<2x256xf32>
    %299 = arith.mulf %298, %175 : vector<2x256xf32>
    %300 = vector.broadcast %127 : f32 to vector<2x256xf32>
    %301 = arith.mulf %300, %177 : vector<2x256xf32>
    %302 = arith.addf %299, %301 : vector<2x256xf32>
    %303 = arith.addf %292, %302 : vector<2x256xf32>
    %304 = vector.broadcast %85 : f32 to vector<2x256xf32>
    %305 = arith.mulf %304, %179 : vector<2x256xf32>
    %306 = vector.broadcast %134 : f32 to vector<2x256xf32>
    %307 = arith.mulf %306, %181 : vector<2x256xf32>
    %308 = arith.addf %305, %307 : vector<2x256xf32>
    %309 = arith.addf %297, %308 : vector<2x256xf32>
    %310 = vector.broadcast %92 : f32 to vector<2x256xf32>
    %311 = arith.mulf %310, %185 : vector<2x256xf32>
    %312 = vector.broadcast %141 : f32 to vector<2x256xf32>
    %313 = arith.mulf %312, %187 : vector<2x256xf32>
    %314 = arith.addf %311, %313 : vector<2x256xf32>
    %315 = arith.addf %303, %314 : vector<2x256xf32>
    %316 = vector.broadcast %99 : f32 to vector<2x256xf32>
    %317 = arith.mulf %316, %191 : vector<2x256xf32>
    %318 = vector.broadcast %148 : f32 to vector<2x256xf32>
    %319 = arith.mulf %318, %193 : vector<2x256xf32>
    %320 = arith.addf %317, %319 : vector<2x256xf32>
    %321 = arith.addf %309, %320 : vector<2x256xf32>
    %322 = vector.broadcast %106 : f32 to vector<2x256xf32>
    %323 = arith.mulf %322, %197 : vector<2x256xf32>
    %324 = vector.broadcast %155 : f32 to vector<2x256xf32>
    %325 = arith.mulf %324, %199 : vector<2x256xf32>
    %326 = arith.addf %323, %325 : vector<2x256xf32>
    %327 = arith.addf %315, %326 : vector<2x256xf32>
    %328 = arith.addf %327, %321 : vector<2x256xf32>
    %c1_i32 = arith.constant 1 : i32
    %329 = tpu.dynamic_rotate %328 by %c1_i32 dim 1 : vector<2x256xf32>, i32 -> vector<2x256xf32>
    %330 = vector.broadcast %57 : vector<1x256xf32> to vector<2x256xf32>
    %331 = arith.mulf %329, %330 : vector<2x256xf32>
    %332 = vector.broadcast %65 : f32 to vector<2x256xf32>
    %333 = arith.mulf %332, %163 : vector<2x256xf32>
    %334 = vector.broadcast %114 : f32 to vector<2x256xf32>
    %335 = arith.mulf %334, %165 : vector<2x256xf32>
    %336 = arith.addf %333, %335 : vector<2x256xf32>
    %337 = vector.broadcast %72 : f32 to vector<2x256xf32>
    %338 = arith.mulf %337, %169 : vector<2x256xf32>
    %339 = vector.broadcast %121 : f32 to vector<2x256xf32>
    %340 = arith.mulf %339, %171 : vector<2x256xf32>
    %341 = arith.addf %338, %340 : vector<2x256xf32>
    %342 = vector.broadcast %79 : f32 to vector<2x256xf32>
    %343 = arith.mulf %342, %175 : vector<2x256xf32>
    %344 = vector.broadcast %128 : f32 to vector<2x256xf32>
    %345 = arith.mulf %344, %177 : vector<2x256xf32>
    %346 = arith.addf %343, %345 : vector<2x256xf32>
    %347 = arith.addf %336, %346 : vector<2x256xf32>
    %348 = vector.broadcast %86 : f32 to vector<2x256xf32>
    %349 = arith.mulf %348, %179 : vector<2x256xf32>
    %350 = vector.broadcast %135 : f32 to vector<2x256xf32>
    %351 = arith.mulf %350, %181 : vector<2x256xf32>
    %352 = arith.addf %349, %351 : vector<2x256xf32>
    %353 = arith.addf %341, %352 : vector<2x256xf32>
    %354 = vector.broadcast %93 : f32 to vector<2x256xf32>
    %355 = arith.mulf %354, %185 : vector<2x256xf32>
    %356 = vector.broadcast %142 : f32 to vector<2x256xf32>
    %357 = arith.mulf %356, %187 : vector<2x256xf32>
    %358 = arith.addf %355, %357 : vector<2x256xf32>
    %359 = arith.addf %347, %358 : vector<2x256xf32>
    %360 = vector.broadcast %100 : f32 to vector<2x256xf32>
    %361 = arith.mulf %360, %191 : vector<2x256xf32>
    %362 = vector.broadcast %149 : f32 to vector<2x256xf32>
    %363 = arith.mulf %362, %193 : vector<2x256xf32>
    %364 = arith.addf %361, %363 : vector<2x256xf32>
    %365 = arith.addf %353, %364 : vector<2x256xf32>
    %366 = vector.broadcast %107 : f32 to vector<2x256xf32>
    %367 = arith.mulf %366, %197 : vector<2x256xf32>
    %368 = vector.broadcast %156 : f32 to vector<2x256xf32>
    %369 = arith.mulf %368, %199 : vector<2x256xf32>
    %370 = arith.addf %367, %369 : vector<2x256xf32>
    %371 = arith.addf %359, %370 : vector<2x256xf32>
    %372 = arith.addf %371, %365 : vector<2x256xf32>
    %373 = vector.broadcast %58 : vector<1x256xf32> to vector<2x256xf32>
    %374 = arith.mulf %372, %373 : vector<2x256xf32>
    %375 = vector.broadcast %66 : f32 to vector<2x256xf32>
    %376 = arith.mulf %375, %163 : vector<2x256xf32>
    %377 = vector.broadcast %115 : f32 to vector<2x256xf32>
    %378 = arith.mulf %377, %165 : vector<2x256xf32>
    %379 = arith.addf %376, %378 : vector<2x256xf32>
    %380 = vector.broadcast %73 : f32 to vector<2x256xf32>
    %381 = arith.mulf %380, %169 : vector<2x256xf32>
    %382 = vector.broadcast %122 : f32 to vector<2x256xf32>
    %383 = arith.mulf %382, %171 : vector<2x256xf32>
    %384 = arith.addf %381, %383 : vector<2x256xf32>
    %385 = vector.broadcast %80 : f32 to vector<2x256xf32>
    %386 = arith.mulf %385, %175 : vector<2x256xf32>
    %387 = vector.broadcast %129 : f32 to vector<2x256xf32>
    %388 = arith.mulf %387, %177 : vector<2x256xf32>
    %389 = arith.addf %386, %388 : vector<2x256xf32>
    %390 = arith.addf %379, %389 : vector<2x256xf32>
    %391 = vector.broadcast %87 : f32 to vector<2x256xf32>
    %392 = arith.mulf %391, %179 : vector<2x256xf32>
    %393 = vector.broadcast %136 : f32 to vector<2x256xf32>
    %394 = arith.mulf %393, %181 : vector<2x256xf32>
    %395 = arith.addf %392, %394 : vector<2x256xf32>
    %396 = arith.addf %384, %395 : vector<2x256xf32>
    %397 = vector.broadcast %94 : f32 to vector<2x256xf32>
    %398 = arith.mulf %397, %185 : vector<2x256xf32>
    %399 = vector.broadcast %143 : f32 to vector<2x256xf32>
    %400 = arith.mulf %399, %187 : vector<2x256xf32>
    %401 = arith.addf %398, %400 : vector<2x256xf32>
    %402 = arith.addf %390, %401 : vector<2x256xf32>
    %403 = vector.broadcast %101 : f32 to vector<2x256xf32>
    %404 = arith.mulf %403, %191 : vector<2x256xf32>
    %405 = vector.broadcast %150 : f32 to vector<2x256xf32>
    %406 = arith.mulf %405, %193 : vector<2x256xf32>
    %407 = arith.addf %404, %406 : vector<2x256xf32>
    %408 = arith.addf %396, %407 : vector<2x256xf32>
    %409 = vector.broadcast %108 : f32 to vector<2x256xf32>
    %410 = arith.mulf %409, %197 : vector<2x256xf32>
    %411 = vector.broadcast %157 : f32 to vector<2x256xf32>
    %412 = arith.mulf %411, %199 : vector<2x256xf32>
    %413 = arith.addf %410, %412 : vector<2x256xf32>
    %414 = arith.addf %402, %413 : vector<2x256xf32>
    %415 = arith.addf %414, %408 : vector<2x256xf32>
    %c255_i32 = arith.constant 255 : i32
    %416 = tpu.dynamic_rotate %415 by %c255_i32 dim 1 : vector<2x256xf32>, i32 -> vector<2x256xf32>
    %417 = vector.broadcast %59 : vector<1x256xf32> to vector<2x256xf32>
    %418 = arith.mulf %416, %417 : vector<2x256xf32>
    %419 = vector.broadcast %67 : f32 to vector<2x256xf32>
    %420 = arith.mulf %419, %163 : vector<2x256xf32>
    %421 = vector.broadcast %116 : f32 to vector<2x256xf32>
    %422 = arith.mulf %421, %165 : vector<2x256xf32>
    %423 = arith.addf %420, %422 : vector<2x256xf32>
    %424 = vector.broadcast %74 : f32 to vector<2x256xf32>
    %425 = arith.mulf %424, %169 : vector<2x256xf32>
    %426 = vector.broadcast %123 : f32 to vector<2x256xf32>
    %427 = arith.mulf %426, %171 : vector<2x256xf32>
    %428 = arith.addf %425, %427 : vector<2x256xf32>
    %429 = vector.broadcast %81 : f32 to vector<2x256xf32>
    %430 = arith.mulf %429, %175 : vector<2x256xf32>
    %431 = vector.broadcast %130 : f32 to vector<2x256xf32>
    %432 = arith.mulf %431, %177 : vector<2x256xf32>
    %433 = arith.addf %430, %432 : vector<2x256xf32>
    %434 = arith.addf %423, %433 : vector<2x256xf32>
    %435 = vector.broadcast %88 : f32 to vector<2x256xf32>
    %436 = arith.mulf %435, %179 : vector<2x256xf32>
    %437 = vector.broadcast %137 : f32 to vector<2x256xf32>
    %438 = arith.mulf %437, %181 : vector<2x256xf32>
    %439 = arith.addf %436, %438 : vector<2x256xf32>
    %440 = arith.addf %428, %439 : vector<2x256xf32>
    %441 = vector.broadcast %95 : f32 to vector<2x256xf32>
    %442 = arith.mulf %441, %185 : vector<2x256xf32>
    %443 = vector.broadcast %144 : f32 to vector<2x256xf32>
    %444 = arith.mulf %443, %187 : vector<2x256xf32>
    %445 = arith.addf %442, %444 : vector<2x256xf32>
    %446 = arith.addf %434, %445 : vector<2x256xf32>
    %447 = vector.broadcast %102 : f32 to vector<2x256xf32>
    %448 = arith.mulf %447, %191 : vector<2x256xf32>
    %449 = vector.broadcast %151 : f32 to vector<2x256xf32>
    %450 = arith.mulf %449, %193 : vector<2x256xf32>
    %451 = arith.addf %448, %450 : vector<2x256xf32>
    %452 = arith.addf %440, %451 : vector<2x256xf32>
    %453 = vector.broadcast %109 : f32 to vector<2x256xf32>
    %454 = arith.mulf %453, %197 : vector<2x256xf32>
    %455 = vector.broadcast %158 : f32 to vector<2x256xf32>
    %456 = arith.mulf %455, %199 : vector<2x256xf32>
    %457 = arith.addf %454, %456 : vector<2x256xf32>
    %458 = arith.addf %446, %457 : vector<2x256xf32>
    %459 = arith.addf %458, %452 : vector<2x256xf32>
    %c254_i32 = arith.constant 254 : i32
    %460 = tpu.dynamic_rotate %459 by %c254_i32 dim 1 : vector<2x256xf32>, i32 -> vector<2x256xf32>
    %461 = vector.broadcast %60 : vector<1x256xf32> to vector<2x256xf32>
    %462 = arith.mulf %460, %461 : vector<2x256xf32>
    %463 = vector.broadcast %68 : f32 to vector<2x256xf32>
    %464 = arith.mulf %463, %163 : vector<2x256xf32>
    %465 = vector.broadcast %117 : f32 to vector<2x256xf32>
    %466 = arith.mulf %465, %165 : vector<2x256xf32>
    %467 = arith.addf %464, %466 : vector<2x256xf32>
    %468 = vector.broadcast %75 : f32 to vector<2x256xf32>
    %469 = arith.mulf %468, %169 : vector<2x256xf32>
    %470 = vector.broadcast %124 : f32 to vector<2x256xf32>
    %471 = arith.mulf %470, %171 : vector<2x256xf32>
    %472 = arith.addf %469, %471 : vector<2x256xf32>
    %473 = vector.broadcast %82 : f32 to vector<2x256xf32>
    %474 = arith.mulf %473, %175 : vector<2x256xf32>
    %475 = vector.broadcast %131 : f32 to vector<2x256xf32>
    %476 = arith.mulf %475, %177 : vector<2x256xf32>
    %477 = arith.addf %474, %476 : vector<2x256xf32>
    %478 = arith.addf %467, %477 : vector<2x256xf32>
    %479 = vector.broadcast %89 : f32 to vector<2x256xf32>
    %480 = arith.mulf %479, %179 : vector<2x256xf32>
    %481 = vector.broadcast %138 : f32 to vector<2x256xf32>
    %482 = arith.mulf %481, %181 : vector<2x256xf32>
    %483 = arith.addf %480, %482 : vector<2x256xf32>
    %484 = arith.addf %472, %483 : vector<2x256xf32>
    %485 = vector.broadcast %96 : f32 to vector<2x256xf32>
    %486 = arith.mulf %485, %185 : vector<2x256xf32>
    %487 = vector.broadcast %145 : f32 to vector<2x256xf32>
    %488 = arith.mulf %487, %187 : vector<2x256xf32>
    %489 = arith.addf %486, %488 : vector<2x256xf32>
    %490 = arith.addf %478, %489 : vector<2x256xf32>
    %491 = vector.broadcast %103 : f32 to vector<2x256xf32>
    %492 = arith.mulf %491, %191 : vector<2x256xf32>
    %493 = vector.broadcast %152 : f32 to vector<2x256xf32>
    %494 = arith.mulf %493, %193 : vector<2x256xf32>
    %495 = arith.addf %492, %494 : vector<2x256xf32>
    %496 = arith.addf %484, %495 : vector<2x256xf32>
    %497 = vector.broadcast %110 : f32 to vector<2x256xf32>
    %498 = arith.mulf %497, %197 : vector<2x256xf32>
    %499 = vector.broadcast %159 : f32 to vector<2x256xf32>
    %500 = arith.mulf %499, %199 : vector<2x256xf32>
    %501 = arith.addf %498, %500 : vector<2x256xf32>
    %502 = arith.addf %490, %501 : vector<2x256xf32>
    %503 = arith.addf %502, %496 : vector<2x256xf32>
    %c253_i32 = arith.constant 253 : i32
    %504 = tpu.dynamic_rotate %503 by %c253_i32 dim 1 : vector<2x256xf32>, i32 -> vector<2x256xf32>
    %505 = vector.broadcast %61 : vector<1x256xf32> to vector<2x256xf32>
    %506 = arith.mulf %504, %505 : vector<2x256xf32>
    %507 = arith.addf %243, %287 : vector<2x256xf32>
    %508 = arith.addf %507, %331 : vector<2x256xf32>
    %509 = arith.addf %508, %374 : vector<2x256xf32>
    %510 = arith.addf %509, %418 : vector<2x256xf32>
    %511 = arith.addf %510, %462 : vector<2x256xf32>
    %512 = arith.addf %511, %506 : vector<2x256xf32>
    %c0_53 = arith.constant 0 : index
    %513 = memref.load %arg6[%c0_53] : memref<1xf32, #tpu.memory_space<smem>>
    %514 = vector.broadcast %513 : f32 to vector<2x256xf32>
    %515 = arith.addf %512, %514 : vector<2x256xf32>
    %516 = arith.negf %515 : vector<2x256xf32>
    %517 = math.exp %516 : vector<2x256xf32>
    %cst_54 = arith.constant 1.000000e+00 : f32
    %518 = vector.broadcast %cst_54 : f32 to vector<2x256xf32>
    %519 = arith.addf %518, %517 : vector<2x256xf32>
    %520 = arith.divf %518, %519 : vector<2x256xf32>
    %521 = vector.shape_cast %520 : vector<2x256xf32> to vector<2x1x256xf32>
    %522 = vector.broadcast %521 : vector<2x1x256xf32> to vector<2x4x256xf32>
    %523 = arith.mulf %43, %522 : vector<2x4x256xf32>
    %c0_55 = arith.constant 0 : index
    %c0_56 = arith.constant 0 : index
    %c0_57 = arith.constant 0 : index
    %524 = vector.load %arg7[%c0_55, %c0_56, %c0_57] : memref<2x4x256xf32, #tpu.memory_space<vmem>>, vector<2x4x256xf32>
    tpu.vector_store %arg7[%c0_55, %c0_56, %c0_57], %523 {strides = array<i32>} : memref<2x4x256xf32, #tpu.memory_space<vmem>>, vector<2x4x256xf32>,
    return
  }
  func.func @transform_0(%arg0: i32) -> (i32, i32, i32) {
    %c0_i32 = arith.constant 0 : i32
    %c0_i32_0 = arith.constant 0 : i32
    %c0_i32_1 = arith.constant 0 : i32
    return %arg0, %c0_i32, %c0_i32_0 : i32, i32, i32
  }
  func.func @transform_1(%arg0: i32) -> (i32, i32) {
    %c0_i32 = arith.constant 0 : i32
    %c0_i32_0 = arith.constant 0 : i32
    %c0_i32_1 = arith.constant 0 : i32
    return %c0_i32, %c0_i32_0 : i32, i32
  }
  func.func @transform_2(%arg0: i32) -> (i32, i32) {
    %c0_i32 = arith.constant 0 : i32
    %c0_i32_0 = arith.constant 0 : i32
    %c0_i32_1 = arith.constant 0 : i32
    return %c0_i32, %c0_i32_0 : i32, i32
  }
  func.func @transform_3(%arg0: i32) -> (i32, i32) {
    %c0_i32 = arith.constant 0 : i32
    %c0_i32_0 = arith.constant 0 : i32
    %c0_i32_1 = arith.constant 0 : i32
    return %c0_i32, %c0_i32_0 : i32, i32
  }
  func.func @transform_4(%arg0: i32) -> i32 {
    %c0_i32 = arith.constant 0 : i32
    %c0_i32_0 = arith.constant 0 : i32
    return %c0_i32 : i32
  }
  func.func @transform_5(%arg0: i32) -> i32 {
    %c0_i32 = arith.constant 0 : i32
    %c0_i32_0 = arith.constant 0 : i32
    return %c0_i32 : i32
  }
  func.func @transform_6(%arg0: i32) -> (i32, i32, i32) {
    %c0_i32 = arith.constant 0 : i32
    %c0_i32_0 = arith.constant 0 : i32
    %c0_i32_1 = arith.constant 0 : i32
    return %arg0, %c0_i32, %c0_i32_0 : i32, i32, i32
  }
}

</mosaic_0001>

<llo_original>
// kernel: tpu_custom_call.1
$region0: #{tpu_custom_call.1}
  #allocation0 [shape = 'u32[]', space=smem, size = 0x4, offset = 0x4, fixed_abs, tag = 'smem constant byte address 0x4 - core index']
  #allocation1 [shape = 'u32[144,128]{1,0:T(1,128)}', space=vmem, size = 0x12000, scoped, tag = 'internal scratch']
  #allocation2 [shape = 'f32[1]{0:T(128)S(6)}', space=smem, size = 0x200, scoped, tag = 'scoped memory for tpu_custom_call.1']
  %s0 = inlined_call_operand.hbm [shape: f32[2,4,256], index: 0, kind: input, shape index: {}]
  %s1 = inlined_call_operand.vmem [shape: f32[2,4], index: 1, kind: input, shape index: {}]
  %s2 = inlined_call_operand.vmem [shape: f32[4,2], index: 2, kind: input, shape index: {}]
  %s3 = inlined_call_operand.hbm [shape: f32[14,256], index: 3, kind: input, shape index: {}]
  %s4 = inlined_call_operand.vmem [shape: f32[98], index: 4, kind: input, shape index: {}]
  %s5 = inlined_call_operand.<no memory space> [shape: f32[1], index: 5, kind: input, shape index: {}]
  %s6 = inlined_call_operand.hbm [shape: f32[2,4,256], index: 6, kind: output, shape index: {}]
  %s7 = sld [smem:[#allocation0]]
  $region46: #{tpu_custom_call.1} parent=0
    _
  %s9 = ssub.s32 1, %s7
  %s10 = scalar_select 0, %s9, %s7
  %11 = sst [smem:[#allocation2]] %s5
  $region1: #{tpu_custom_call.1} parent=0
    #allocation3 [shape = 'u8[8192]{0}', space=vmem, size = 0x2000, scoped, tag = 'input window, operand 0, single buffered']
    #allocation4 [shape = 's32[1]{0}', space=sflag, size = 0x4, scoped, tag = 'scoped memory for tpu_custom_call.1']
    #allocation5 [shape = 's32[1]{0}', space=sflag, size = 0x4, scoped, tag = 'scoped memory for tpu_custom_call.1']
    #allocation6 [shape = 's32[1]{0}', space=sflag, size = 0x4, scoped, tag = 'scoped memory for tpu_custom_call.1']
    #allocation7 [shape = 'u8[16384]{0}', space=vmem, size = 0x4000, scoped, tag = 'input window, operand 3, single buffered']
    #allocation8 [shape = 's32[1]{0}', space=sflag, size = 0x4, scoped, tag = 'scoped memory for tpu_custom_call.1']
    #allocation9 [shape = 'u8[512]{0}', space=smem, size = 0x200, scoped, tag = 'input window, operand 4, single buffered']
    #allocation10 [shape = 'u8[8192]{0}', space=vmem, size = 0x2000, scoped, tag = 'output window, operand 0, single buffered']
    %12 = vsyncpa [#allocation4], 0
    %13 = vsyncpa [#allocation8], 0
    %14 = vsyncpa [#allocation6], 0
    %15 = vsyncpa [#allocation5], 0
    // Predicated region
    $region2: #{tpu_custom_call.1} parent=1 // pred_check
      _
    $region3: #{tpu_custom_call.1} parent=1 // pred_check_branch
      %17 = sbr.rel (0) target = $region5
    $region4: #{tpu_custom_call.1} parent=1 // pred_region
      %s19 = ssub.s32 256, 256
      %20 = vsyncadd [#allocation4], %s19
      %s21 = sshll.u32 [#allocation3], 4
      %s22 = int_to_ptr.vmem [resolvable:$true] %s21
      %27 = dma.hbm_to_vmem [thread:$0]  %s0, 256, %s22, [#allocation4], 128, 128, 8
    $region5: #{tpu_custom_call.1} parent=1 // pred_fallthru
      _
    // Predicated region
    $region6: #{tpu_custom_call.1} parent=1 // pred_check
      _
    $region7: #{tpu_custom_call.1} parent=1 // pred_check_branch
      %29 = sbr.rel (0) target = $region9
    $region8: #{tpu_custom_call.1} parent=1 // pred_region
      _
    $region9: #{tpu_custom_call.1} parent=1 // pred_fallthru
      _
    // Predicated region
    $region10: #{tpu_custom_call.1} parent=1 // pred_check
      _
    $region11: #{tpu_custom_call.1} parent=1 // pred_check_branch
      %31 = sbr.rel (0) target = $region13
    $region12: #{tpu_custom_call.1} parent=1 // pred_region
      _
    $region13: #{tpu_custom_call.1} parent=1 // pred_fallthru
      _
    // Predicated region
    $region14: #{tpu_custom_call.1} parent=1 // pred_check
      _
    $region15: #{tpu_custom_call.1} parent=1 // pred_check_branch
      %33 = sbr.rel (0) target = $region17
    $region16: #{tpu_custom_call.1} parent=1 // pred_region
      %s35 = ssub.s32 512, 512
      %36 = vsyncadd [#allocation8], %s35
      %s37 = sshll.u32 [#allocation7], 4
      %s38 = int_to_ptr.vmem [resolvable:$true] %s37
      %43 = dma.hbm_to_vmem [thread:$0]  %s3, 512, %s38, [#allocation8], 256, 256, 16
    $region17: #{tpu_custom_call.1} parent=1 // pred_fallthru
      _
    // Predicated region
    $region18: #{tpu_custom_call.1} parent=1 // pred_check
      _
    $region19: #{tpu_custom_call.1} parent=1 // pred_check_branch
      %45 = sbr.rel (0) target = $region21
    $region20: #{tpu_custom_call.1} parent=1 // pred_region
      %s47 = ssub.s32 16, 16
      %48 = vsyncadd [#allocation6], %s47
      %s50 = sshll.u32 %s4, 4
      %s51 = int_to_ptr.vmem [resolvable:$true] %s50
      %53 = dma.vmem_to_smem %s51, 16, [#allocation9], [#allocation6]
    $region21: #{tpu_custom_call.1} parent=1 // pred_fallthru
      _
    // Predicated region
    $region22: #{tpu_custom_call.1} parent=1 // pred_check
      _
    $region23: #{tpu_custom_call.1} parent=1 // pred_check_branch
      %55 = sbr.rel (0) target = $region25
    $region24: #{tpu_custom_call.1} parent=1 // pred_region
      _
    $region25: #{tpu_custom_call.1} parent=1 // pred_fallthru
      _
    // Predicated region
    $region26: #{tpu_custom_call.1} parent=1 // pred_check
      _
    $region27: #{tpu_custom_call.1} parent=1 // pred_check_branch
      %57 = sbr.rel (0) target = $region29
    $region28: #{tpu_custom_call.1} parent=1 // pred_region
      %58 = dma.done [#allocation4], 256
    $region29: #{tpu_custom_call.1} parent=1 // pred_fallthru
      _
    // Predicated region
    $region30: #{tpu_custom_call.1} parent=1 // pred_check
      _
    $region31: #{tpu_custom_call.1} parent=1 // pred_check_branch
      %60 = sbr.rel (0) target = $region33
    $region32: #{tpu_custom_call.1} parent=1 // pred_region
      %61 = dma.done [#allocation8], 512
    $region33: #{tpu_custom_call.1} parent=1 // pred_fallthru
      _
    // Predicated region
    $region34: #{tpu_custom_call.1} parent=1 // pred_check
      _
    $region35: #{tpu_custom_call.1} parent=1 // pred_check_branch
      %63 = sbr.rel (0) target = $region37
    $region36: #{tpu_custom_call.1} parent=1 // pred_region
      %64 = dma.done [#allocation6], 16
    $region37: #{tpu_custom_call.1} parent=1 // pred_fallthru
      _
    %65 = sfence
    %v66 = vld [vmem:[#allocation3] sm:$0xff]
    %v67 = vld [vmem:[#allocation3 + $0x8] sm:$0xff]
    %v70 = vcombine.high %v66, %v66
    %v71 = vcombine.high %v67, %v67
    %vm74 = vcmask 1043456
    %v75 = vsel %vm74, %v66, 0.0
    %v76 = vsel %vm74, %v70, 0.0
    %v77 = vadd.f32 %v75, %v76
    %78 = vadd.xlane.f32.xlu0 %v77
    %v79 = vpop.xlane.xlu0 %78
    %v80 = vsel %vm74, %v67, 0.0
    %v81 = vsel %vm74, %v71, 0.0
    %v82 = vadd.f32 %v80, %v81
    %83 = vadd.xlane.f32.xlu0 %v82
    %v84 = vpop.xlane.xlu0 %83
    %v85 = vrcp.pop 256.0
    %v86 = vmul.f32 %v79, %v85
    %v87 = vmul.f32 %v84, %v85
    %v88 = vsel %vm74, %v66, -inf
    %v89 = vsel %vm74, %v70, -inf
    %v90 = vmax.f32 %v88, %v89
    %91 = vmax.xlane.f32.xlu0 %v90
    %v92 = vpop.xlane.xlu0 %91
    %v93 = vsel %vm74, %v67, -inf
    %v94 = vsel %vm74, %v71, -inf
    %v95 = vmax.f32 %v93, %v94
    %96 = vmax.xlane.f32.xlu0 %v95
    %v97 = vpop.xlane.xlu0 %96
    %v98 = vld [vmem:[%s1] sm:$0x3]
    %v99 = vld [vmem:[%s2] sm:$0xf]
    %v101 = vlaneseq
    %v102 = vshrl.u32 %v101, 7
    %v103 = vsub.s32 0, %v102
    %v104 = vrot.slane %v98, %v103
    %106 = vbcast.lane.b32.xlu0 %v104, 256
    %v107 = vpop.permute.xlu0 %106
    %v108 = vlaneseq
    %v109 = vshrl.u32 %v108, 7
    %v110 = vsub.s32 1, %v109
    %v111 = vrot.slane %v98, %v110
    %113 = vbcast.lane.b32.xlu0 %v111, 256
    %v114 = vpop.permute.xlu0 %113
    %v117 = vmul.f32 %v86, %v107
    %v118 = vmul.f32 %v86, %v114
    %v119 = vmul.f32 %v87, %v107
    %v120 = vmul.f32 %v87, %v114
    %125 = vset.pattern.permute.xlu0 0
    %126 = vperm.xlu0 %125, %v117
    %v127 = vpop.permute.xlu0 %126
    %128 = vset.pattern.permute.xlu0 0
    %129 = vperm.xlu0 %128, %v118
    %v130 = vpop.permute.xlu0 %129
    %131 = vset.pattern.permute.xlu0 0
    %132 = vperm.xlu0 %131, %v119
    %v133 = vpop.permute.xlu0 %132
    %134 = vset.pattern.permute.xlu0 0
    %135 = vperm.xlu0 %134, %v120
    %v136 = vpop.permute.xlu0 %135
    %v137 = vlaneseq
    %v138 = vand.u32 %v137, 127
    %v139 = vlaneseq
    %v140 = vshrl.u32 %v139, 7
    %v141 = vsub.s32 %v138, %v140
    %v142 = vrot.slane %v127, %v141
    %v143 = vlaneseq
    %v144 = vshrl.u32 %v143, 7
    %v145 = vsub.s32 %v138, %v144
    %v146 = vrot.slane %v130, %v145
    %v147 = vlaneseq
    %v148 = vshrl.u32 %v147, 7
    %v149 = vsub.s32 %v138, %v148
    %v150 = vrot.slane %v133, %v149
    %v151 = vlaneseq
    %v152 = vshrl.u32 %v151, 7
    %v153 = vsub.s32 %v138, %v152
    %v154 = vrot.slane %v136, %v153
    %vm155 = vcmask 1041409
    %v156 = vsel %vm155, %v146, %v142
    %v157 = vsel %vm155, %v154, %v150
    %vm160 = vcmask 25600
    %v161 = vsel %vm160, %v156, 0.0
    %162 = vadd.xlane.f32.xlu0 %v161
    %v163 = vpop.xlane.xlu0 %162
    %v164 = vsel %vm160, %v157, 0.0
    %165 = vadd.xlane.f32.xlu0 %v164
    %v166 = vpop.xlane.xlu0 %165
    %v167 = vmax.f32 %v163, 0.0
    %v168 = vmax.f32 %v166, 0.0
    %v170 = vlaneseq
    %v171 = vshrl.u32 %v170, 7
    %v172 = vsub.s32 0, %v171
    %v173 = vrot.slane %v99, %v172
    %175 = vbcast.lane.b32.xlu0 %v173, 256
    %v176 = vpop.permute.xlu0 %175
    %v177 = vlaneseq
    %v178 = vshrl.u32 %v177, 7
    %v179 = vsub.s32 1, %v178
    %v180 = vrot.slane %v99, %v179
    %182 = vbcast.lane.b32.xlu0 %v180, 256
    %v183 = vpop.permute.xlu0 %182
    %v184 = vlaneseq
    %v185 = vshrl.u32 %v184, 7
    %v186 = vsub.s32 2, %v185
    %v187 = vrot.slane %v99, %v186
    %189 = vbcast.lane.b32.xlu0 %v187, 256
    %v190 = vpop.permute.xlu0 %189
    %v191 = vlaneseq
    %v192 = vshrl.u32 %v191, 7
    %v193 = vsub.s32 3, %v192
    %v194 = vrot.slane %v99, %v193
    %196 = vbcast.lane.b32.xlu0 %v194, 256
    %v197 = vpop.permute.xlu0 %196
    %v202 = vmul.f32 %v167, %v176
    %v203 = vmul.f32 %v167, %v183
    %v204 = vmul.f32 %v167, %v190
    %v205 = vmul.f32 %v167, %v197
    %v206 = vmul.f32 %v168, %v176
    %v207 = vmul.f32 %v168, %v183
    %v208 = vmul.f32 %v168, %v190
    %v209 = vmul.f32 %v168, %v197
    %218 = vset.pattern.permute.xlu0 0
    %219 = vperm.xlu0 %218, %v202
    %v220 = vpop.permute.xlu0 %219
    %221 = vset.pattern.permute.xlu0 0
    %222 = vperm.xlu0 %221, %v203
    %v223 = vpop.permute.xlu0 %222
    %224 = vset.pattern.permute.xlu0 0
    %225 = vperm.xlu0 %224, %v204
    %v226 = vpop.permute.xlu0 %225
    %227 = vset.pattern.permute.xlu0 0
    %228 = vperm.xlu0 %227, %v205
    %v229 = vpop.permute.xlu0 %228
    %230 = vset.pattern.permute.xlu0 0
    %231 = vperm.xlu0 %230, %v206
    %v232 = vpop.permute.xlu0 %231
    %233 = vset.pattern.permute.xlu0 0
    %234 = vperm.xlu0 %233, %v207
    %v235 = vpop.permute.xlu0 %234
    %236 = vset.pattern.permute.xlu0 0
    %237 = vperm.xlu0 %236, %v208
    %v238 = vpop.permute.xlu0 %237
    %239 = vset.pattern.permute.xlu0 0
    %240 = vperm.xlu0 %239, %v209
    %v241 = vpop.permute.xlu0 %240
    %v242 = vlaneseq
    %v243 = vshrl.u32 %v242, 7
    %v244 = vsub.s32 %v138, %v243
    %v245 = vrot.slane %v220, %v244
    %v246 = vlaneseq
    %v247 = vshrl.u32 %v246, 7
    %v248 = vsub.s32 %v138, %v247
    %v249 = vrot.slane %v223, %v248
    %v250 = vlaneseq
    %v251 = vshrl.u32 %v250, 7
    %v252 = vsub.s32 %v138, %v251
    %v253 = vrot.slane %v226, %v252
    %v254 = vlaneseq
    %v255 = vshrl.u32 %v254, 7
    %v256 = vsub.s32 %v138, %v255
    %v257 = vrot.slane %v229, %v256
    %v258 = vlaneseq
    %v259 = vshrl.u32 %v258, 7
    %v260 = vsub.s32 %v138, %v259
    %v261 = vrot.slane %v232, %v260
    %v262 = vlaneseq
    %v263 = vshrl.u32 %v262, 7
    %v264 = vsub.s32 %v138, %v263
    %v265 = vrot.slane %v235, %v264
    %v266 = vlaneseq
    %v267 = vshrl.u32 %v266, 7
    %v268 = vsub.s32 %v138, %v267
    %v269 = vrot.slane %v238, %v268
    %v270 = vlaneseq
    %v271 = vshrl.u32 %v270, 7
    %v272 = vsub.s32 %v138, %v271
    %v273 = vrot.slane %v241, %v272
    %v274 = vsel %vm155, %v249, %v245
    %vm275 = vcmask 1042434
    %v276 = vsel %vm275, %v253, %v274
    %vm277 = vcmask 1043459
    %v278 = vsel %vm277, %v257, %v276
    %v279 = vsel %vm155, %v265, %v261
    %v280 = vsel %vm275, %v269, %v279
    %v281 = vsel %vm277, %v273, %v280
    %vm284 = vcmask 11264
    %v285 = vsel %vm284, %v278, 0.0
    %286 = vadd.xlane.f32.xlu0 %v285
    %v287 = vpop.xlane.xlu0 %286
    %v288 = vsel %vm284, %v281, 0.0
    %289 = vadd.xlane.f32.xlu0 %v288
    %v290 = vpop.xlane.xlu0 %289
    %v291 = vmul.f32 %v92, %v107
    %v292 = vmul.f32 %v92, %v114
    %v293 = vmul.f32 %v97, %v107
    %v294 = vmul.f32 %v97, %v114
    %299 = vset.pattern.permute.xlu0 0
    %300 = vperm.xlu0 %299, %v291
    %v301 = vpop.permute.xlu0 %300
    %302 = vset.pattern.permute.xlu0 0
    %303 = vperm.xlu0 %302, %v292
    %v304 = vpop.permute.xlu0 %303
    %305 = vset.pattern.permute.xlu0 0
    %306 = vperm.xlu0 %305, %v293
    %v307 = vpop.permute.xlu0 %306
    %308 = vset.pattern.permute.xlu0 0
    %309 = vperm.xlu0 %308, %v294
    %v310 = vpop.permute.xlu0 %309
    %v311 = vlaneseq
    %v312 = vshrl.u32 %v311, 7
    %v313 = vsub.s32 %v138, %v312
    %v314 = vrot.slane %v301, %v313
    %v315 = vlaneseq
    %v316 = vshrl.u32 %v315, 7
    %v317 = vsub.s32 %v138, %v316
    %v318 = vrot.slane %v304, %v317
    %v319 = vlaneseq
    %v320 = vshrl.u32 %v319, 7
    %v321 = vsub.s32 %v138, %v320
    %v322 = vrot.slane %v307, %v321
    %v323 = vlaneseq
    %v324 = vshrl.u32 %v323, 7
    %v325 = vsub.s32 %v138, %v324
    %v326 = vrot.slane %v310, %v325
    %v327 = vsel %vm155, %v318, %v314
    %v328 = vsel %vm155, %v326, %v322
    %v331 = vsel %vm160, %v327, 0.0
    %332 = vadd.xlane.f32.xlu0 %v331
    %v333 = vpop.xlane.xlu0 %332
    %v334 = vsel %vm160, %v328, 0.0
    %335 = vadd.xlane.f32.xlu0 %v334
    %v336 = vpop.xlane.xlu0 %335
    %v337 = vmax.f32 %v333, 0.0
    %v338 = vmax.f32 %v336, 0.0
    %v339 = vmul.f32 %v337, %v176
    %v340 = vmul.f32 %v337, %v183
    %v341 = vmul.f32 %v337, %v190
    %v342 = vmul.f32 %v337, %v197
    %v343 = vmul.f32 %v338, %v176
    %v344 = vmul.f32 %v338, %v183
    %v345 = vmul.f32 %v338, %v190
    %v346 = vmul.f32 %v338, %v197
    %355 = vset.pattern.permute.xlu0 0
    %356 = vperm.xlu0 %355, %v339
    %v357 = vpop.permute.xlu0 %356
    %358 = vset.pattern.permute.xlu0 0
    %359 = vperm.xlu0 %358, %v340
    %v360 = vpop.permute.xlu0 %359
    %361 = vset.pattern.permute.xlu0 0
    %362 = vperm.xlu0 %361, %v341
    %v363 = vpop.permute.xlu0 %362
    %364 = vset.pattern.permute.xlu0 0
    %365 = vperm.xlu0 %364, %v342
    %v366 = vpop.permute.xlu0 %365
    %367 = vset.pattern.permute.xlu0 0
    %368 = vperm.xlu0 %367, %v343
    %v369 = vpop.permute.xlu0 %368
    %370 = vset.pattern.permute.xlu0 0
    %371 = vperm.xlu0 %370, %v344
    %v372 = vpop.permute.xlu0 %371
    %373 = vset.pattern.permute.xlu0 0
    %374 = vperm.xlu0 %373, %v345
    %v375 = vpop.permute.xlu0 %374
    %376 = vset.pattern.permute.xlu0 0
    %377 = vperm.xlu0 %376, %v346
    %v378 = vpop.permute.xlu0 %377
    %v379 = vlaneseq
    %v380 = vshrl.u32 %v379, 7
    %v381 = vsub.s32 %v138, %v380
    %v382 = vrot.slane %v357, %v381
    %v383 = vlaneseq
    %v384 = vshrl.u32 %v383, 7
    %v385 = vsub.s32 %v138, %v384
    %v386 = vrot.slane %v360, %v385
    %v387 = vlaneseq
    %v388 = vshrl.u32 %v387, 7
    %v389 = vsub.s32 %v138, %v388
    %v390 = vrot.slane %v363, %v389
    %v391 = vlaneseq
    %v392 = vshrl.u32 %v391, 7
    %v393 = vsub.s32 %v138, %v392
    %v394 = vrot.slane %v366, %v393
    %v395 = vlaneseq
    %v396 = vshrl.u32 %v395, 7
    %v397 = vsub.s32 %v138, %v396
    %v398 = vrot.slane %v369, %v397
    %v399 = vlaneseq
    %v400 = vshrl.u32 %v399, 7
    %v401 = vsub.s32 %v138, %v400
    %v402 = vrot.slane %v372, %v401
    %v403 = vlaneseq
    %v404 = vshrl.u32 %v403, 7
    %v405 = vsub.s32 %v138, %v404
    %v406 = vrot.slane %v375, %v405
    %v407 = vlaneseq
    %v408 = vshrl.u32 %v407, 7
    %v409 = vsub.s32 %v138, %v408
    %v410 = vrot.slane %v378, %v409
    %v411 = vsel %vm155, %v386, %v382
    %v412 = vsel %vm275, %v390, %v411
    %v413 = vsel %vm277, %v394, %v412
    %v414 = vsel %vm155, %v402, %v398
    %v415 = vsel %vm275, %v406, %v414
    %v416 = vsel %vm277, %v410, %v415
    %v419 = vsel %vm284, %v413, 0.0
    %420 = vadd.xlane.f32.xlu0 %v419
    %v421 = vpop.xlane.xlu0 %420
    %v422 = vsel %vm284, %v416, 0.0
    %423 = vadd.xlane.f32.xlu0 %v422
    %v424 = vpop.xlane.xlu0 %423
    %v425 = vadd.f32 %v287, %v421
    %v426 = vadd.f32 %v290, %v424
    %v427 = vxor.u32 %v425, 2147483648
    %v428 = vxor.u32 %v426, 2147483648
    %v429 = vmul.f32 %v427, 1.442695
    %v430 = vpow.pop %v429
    %v431 = vmul.f32 %v428, 1.442695
    %v432 = vpow.pop %v431
    %v433 = vadd.f32 %v430, 1.0
    %v434 = vadd.f32 %v432, 1.0
    %v435 = vrcp.pop %v433
    %v436 = vmul.f32 1.0, %v435
    %v437 = vrcp.pop %v434
    %v438 = vmul.f32 1.0, %v437
    %v442 = vunpack.c.l.s4 839922192
    %v443 = vunpack.c.0.s8 %v442
    %v444 = vlaneseq
    %v445 = vshrl.u32 %v444, 7
    %v446 = vsub.s32 %v443, %v445
    %v447 = vrot.slane %v436, %v446
    %v449 = vunpack.c.l.s4 839922192
    %v450 = vunpack.c.0.s8 %v449
    %v451 = vlaneseq
    %v452 = vshrl.u32 %v451, 7
    %v453 = vsub.s32 %v450, %v452
    %v454 = vrot.slane %v438, %v453
    %v457 = vmul.f32 %v66, %v447
    %v458 = vmul.f32 %v67, %v454
    %v461 = vcombine.high %v457, %v457
    %v462 = vcombine.high %v458, %v458
    %v465 = vsel %vm74, %v457, 0.0
    %v466 = vrot.slane %v465, 4
    %v467 = vadd.f32 %v465, %v466
    %v468 = vrot.slane %v467, 2
    %v469 = vadd.f32 %v467, %v468
    %v470 = vrot.slane %v469, 1
    %v471 = vadd.f32 %v469, %v470
    %v472 = vsel %vm74, %v461, 0.0
    %v473 = vrot.slane %v472, 4
    %v474 = vadd.f32 %v472, %v473
    %v475 = vrot.slane %v474, 2
    %v476 = vadd.f32 %v474, %v475
    %v477 = vrot.slane %v476, 1
    %v478 = vadd.f32 %v476, %v477
    %v479 = vsel %vm74, %v458, 0.0
    %v480 = vrot.slane %v479, 4
    %v481 = vadd.f32 %v479, %v480
    %v482 = vrot.slane %v481, 2
    %v483 = vadd.f32 %v481, %v482
    %v484 = vrot.slane %v483, 1
    %v485 = vadd.f32 %v483, %v484
    %v486 = vsel %vm74, %v462, 0.0
    %v487 = vrot.slane %v486, 4
    %v488 = vadd.f32 %v486, %v487
    %v489 = vrot.slane %v488, 2
    %v490 = vadd.f32 %v488, %v489
    %v491 = vrot.slane %v490, 1
    %v492 = vadd.f32 %v490, %v491
    %v493 = vrcp.pop 4.0
    %v494 = vmul.f32 %v471, %v493
    %v495 = vmul.f32 %v478, %v493
    %v496 = vmul.f32 %v485, %v493
    %v497 = vmul.f32 %v492, %v493
    %v498 = vsel %vm74, %v457, -inf
    %v499 = vrot.slane %v498, 4
    %v500 = vmax.f32 %v498, %v499
    %v501 = vrot.slane %v500, 2
    %v502 = vmax.f32 %v500, %v501
    %v503 = vrot.slane %v502, 1
    %v504 = vmax.f32 %v502, %v503
    %v505 = vsel %vm74, %v461, -inf
    %v506 = vrot.slane %v505, 4
    %v507 = vmax.f32 %v505, %v506
    %v508 = vrot.slane %v507, 2
    %v509 = vmax.f32 %v507, %v508
    %v510 = vrot.slane %v509, 1
    %v511 = vmax.f32 %v509, %v510
    %v512 = vsel %vm74, %v458, -inf
    %v513 = vrot.slane %v512, 4
    %v514 = vmax.f32 %v512, %v513
    %v515 = vrot.slane %v514, 2
    %v516 = vmax.f32 %v514, %v515
    %v517 = vrot.slane %v516, 1
    %v518 = vmax.f32 %v516, %v517
    %v519 = vsel %vm74, %v462, -inf
    %v520 = vrot.slane %v519, 4
    %v521 = vmax.f32 %v519, %v520
    %v522 = vrot.slane %v521, 2
    %v523 = vmax.f32 %v521, %v522
    %v524 = vrot.slane %v523, 1
    %v525 = vmax.f32 %v523, %v524
    %v526 = vld [vmem:[#allocation7] ss:$8 sm:$0x3]
    %s527 = scalar_lea.vmem [#allocation7], 1
    %v528 = vld [vmem:[%s527] ss:$8 sm:$0x3]
    %s529 = scalar_lea.vmem [#allocation7], 2
    %v530 = vld [vmem:[%s529] ss:$8 sm:$0x3]
    %s531 = scalar_lea.vmem [#allocation7], 3
    %v532 = vld [vmem:[%s531] ss:$8 sm:$0x3]
    %s533 = scalar_lea.vmem [#allocation7], 4
    %v534 = vld [vmem:[%s533] ss:$8 sm:$0x3]
    %s535 = scalar_lea.vmem [#allocation7], 5
    %v536 = vld [vmem:[%s535] ss:$8 sm:$0x3]
    %s537 = scalar_lea.vmem [#allocation7], 6
    %v538 = vld [vmem:[%s537] ss:$8 sm:$0x3]
    %s539 = scalar_lea.vmem [#allocation7], 7
    %v540 = vld [vmem:[%s539] ss:$8 sm:$0x3]
    %s541 = scalar_lea.vmem [#allocation7], 16
    %v542 = vld [vmem:[%s541] ss:$8 sm:$0x3]
    %s543 = scalar_lea.vmem [#allocation7], 17
    %v544 = vld [vmem:[%s543] ss:$8 sm:$0x3]
    %s545 = scalar_lea.vmem [#allocation7], 18
    %v546 = vld [vmem:[%s545] ss:$8 sm:$0x3]
    %s547 = scalar_lea.vmem [#allocation7], 19
    %v548 = vld [vmem:[%s547] ss:$8 sm:$0x3]
    %s549 = scalar_lea.vmem [#allocation7], 20
    %v550 = vld [vmem:[%s549] ss:$8 sm:$0x3]
    %s551 = scalar_lea.vmem [#allocation7], 21
    %v552 = vld [vmem:[%s551] ss:$8 sm:$0x3]
    %s553 = sld [smem:[#allocation9]]
    %s554 = sld [smem:[#allocation9 + $0x1]]
    %s555 = sld [smem:[#allocation9 + $0x2]]
    %s556 = sld [smem:[#allocation9 + $0x3]]
    %s557 = sld [smem:[#allocation9 + $0x4]]
    %s558 = sld [smem:[#allocation9 + $0x5]]
    %s559 = sld [smem:[#allocation9 + $0x6]]
    %s560 = sld [smem:[#allocation9 + $0x7]]
    %s561 = sld [smem:[#allocation9 + $0x8]]
    %s562 = sld [smem:[#allocation9 + $0x9]]
    %s563 = sld [smem:[#allocation9 + $0xa]]
    %s564 = sld [smem:[#allocation9 + $0xb]]
    %s565 = sld [smem:[#allocation9 + $0xc]]
    %s566 = sld [smem:[#allocation9 + $0xd]]
    %s567 = sld [smem:[#allocation9 + $0xe]]
    %s568 = sld [smem:[#allocation9 + $0xf]]
    %s569 = sld [smem:[#allocation9 + $0x10]]
    %s570 = sld [smem:[#allocation9 + $0x11]]
    %s571 = sld [smem:[#allocation9 + $0x12]]
    %s572 = sld [smem:[#allocation9 + $0x13]]
    %s573 = sld [smem:[#allocation9 + $0x14]]
    %s574 = sld [smem:[#allocation9 + $0x15]]
    %s575 = sld [smem:[#allocation9 + $0x16]]
    %s576 = sld [smem:[#allocation9 + $0x17]]
    %s577 = sld [smem:[#allocation9 + $0x18]]
    %s578 = sld [smem:[#allocation9 + $0x19]]
    %s579 = sld [smem:[#allocation9 + $0x1a]]
    %s580 = sld [smem:[#allocation9 + $0x1b]]
    %s581 = sld [smem:[#allocation9 + $0x1c]]
    %s582 = sld [smem:[#allocation9 + $0x1d]]
    %s583 = sld [smem:[#allocation9 + $0x1e]]
    %s584 = sld [smem:[#allocation9 + $0x1f]]
    %s585 = sld [smem:[#allocation9 + $0x20]]
    %s586 = sld [smem:[#allocation9 + $0x21]]
    %s587 = sld [smem:[#allocation9 + $0x22]]
    %s588 = sld [smem:[#allocation9 + $0x23]]
    %s589 = sld [smem:[#allocation9 + $0x24]]
    %s590 = sld [smem:[#allocation9 + $0x25]]
    %s591 = sld [smem:[#allocation9 + $0x26]]
    %s592 = sld [smem:[#allocation9 + $0x27]]
    %s593 = sld [smem:[#allocation9 + $0x28]]
    %s594 = sld [smem:[#allocation9 + $0x29]]
    %s595 = sld [smem:[#allocation9 + $0x2a]]
    %s596 = sld [smem:[#allocation9 + $0x2b]]
    %s597 = sld [smem:[#allocation9 + $0x2c]]
    %s598 = sld [smem:[#allocation9 + $0x2d]]
    %s599 = sld [smem:[#allocation9 + $0x2e]]
    %s600 = sld [smem:[#allocation9 + $0x2f]]
    %s601 = sld [smem:[#allocation9 + $0x30]]
    %s602 = sld [smem:[#allocation9 + $0x31]]
    %s603 = sld [smem:[#allocation9 + $0x32]]
    %s604 = sld [smem:[#allocation9 + $0x33]]
    %s605 = sld [smem:[#allocation9 + $0x34]]
    %s606 = sld [smem:[#allocation9 + $0x35]]
    %s607 = sld [smem:[#allocation9 + $0x36]]
    %s608 = sld [smem:[#allocation9 + $0x37]]
    %s609 = sld [smem:[#allocation9 + $0x38]]
    %s610 = sld [smem:[#allocation9 + $0x39]]
    %s611 = sld [smem:[#allocation9 + $0x3a]]
    %s612 = sld [smem:[#allocation9 + $0x3b]]
    %s613 = sld [smem:[#allocation9 + $0x3c]]
    %s614 = sld [smem:[#allocation9 + $0x3d]]
    %s615 = sld [smem:[#allocation9 + $0x3e]]
    %s616 = sld [smem:[#allocation9 + $0x3f]]
    %s617 = sld [smem:[#allocation9 + $0x40]]
    %s618 = sld [smem:[#allocation9 + $0x41]]
    %s619 = sld [smem:[#allocation9 + $0x42]]
    %s620 = sld [smem:[#allocation9 + $0x43]]
    %s621 = sld [smem:[#allocation9 + $0x44]]
    %s622 = sld [smem:[#allocation9 + $0x45]]
    %s623 = sld [smem:[#allocation9 + $0x46]]
    %s624 = sld [smem:[#allocation9 + $0x47]]
    %s625 = sld [smem:[#allocation9 + $0x48]]
    %s626 = sld [smem:[#allocation9 + $0x49]]
    %s627 = sld [smem:[#allocation9 + $0x4a]]
    %s628 = sld [smem:[#allocation9 + $0x4b]]
    %s629 = sld [smem:[#allocation9 + $0x4c]]
    %s630 = sld [smem:[#allocation9 + $0x4d]]
    %s631 = sld [smem:[#allocation9 + $0x4e]]
    %s632 = sld [smem:[#allocation9 + $0x4f]]
    %s633 = sld [smem:[#allocation9 + $0x50]]
    %s634 = sld [smem:[#allocation9 + $0x51]]
    %s635 = sld [smem:[#allocation9 + $0x52]]
    %s636 = sld [smem:[#allocation9 + $0x53]]
    %s637 = sld [smem:[#allocation9 + $0x54]]
    %s638 = sld [smem:[#allocation9 + $0x55]]
    %s639 = sld [smem:[#allocation9 + $0x56]]
    %s640 = sld [smem:[#allocation9 + $0x57]]
    %s641 = sld [smem:[#allocation9 + $0x58]]
    %s642 = sld [smem:[#allocation9 + $0x59]]
    %s643 = sld [smem:[#allocation9 + $0x5a]]
    %s644 = sld [smem:[#allocation9 + $0x5b]]
    %s645 = sld [smem:[#allocation9 + $0x5c]]
    %s646 = sld [smem:[#allocation9 + $0x5d]]
    %s647 = sld [smem:[#allocation9 + $0x5e]]
    %s648 = sld [smem:[#allocation9 + $0x5f]]
    %s649 = sld [smem:[#allocation9 + $0x60]]
    %s650 = sld [smem:[#allocation9 + $0x61]]
    %v655 = vsel %vm155, %v496, %v494
    %v656 = vsel %vm155, %v497, %v495
    %659 = vrot.lane.b32.xlu0 %v655, 48
    %v660 = vpop.permute.xlu0 %659
    %661 = vrot.lane.b32.xlu0 %v656, 48
    %v662 = vpop.permute.xlu0 %661
    %vm663 = vcmp.lt.s32.totalorder %v138, 48
    %v664 = vsel %vm663, %v660, %v662
    %v665 = vsel %vm663, %v662, %v660
    %v670 = vsel %vm155, %v518, %v504
    %v671 = vsel %vm155, %v525, %v511
    %674 = vrot.lane.b32.xlu0 %v670, 48
    %v675 = vpop.permute.xlu0 %674
    %676 = vrot.lane.b32.xlu0 %v671, 48
    %v677 = vpop.permute.xlu0 %676
    %v678 = vsel %vm663, %v675, %v677
    %v679 = vsel %vm663, %v677, %v675
    %v681 = vlaneseq
    %v682 = vshrl.u32 %v681, 7
    %v683 = vsub.s32 0, %v682
    %v684 = vrot.slane %v526, %v683
    %v685 = vlaneseq
    %v686 = vshrl.u32 %v685, 7
    %v687 = vsub.s32 1, %v686
    %v688 = vrot.slane %v526, %v687
    %v691 = vmul.f32 %v665, %v684
    %v692 = vmul.f32 %v664, %v688
    %v693 = vmul.f32 %v679, %v684
    %v694 = vmul.f32 %v678, %v688
    %695 = vrot.lane.b32.xlu0 %v655, 32
    %v696 = vpop.permute.xlu0 %695
    %697 = vrot.lane.b32.xlu0 %v656, 32
    %v698 = vpop.permute.xlu0 %697
    %vm699 = vcmp.lt.s32.totalorder %v138, 32
    %v700 = vsel %vm699, %v696, %v698
    %v701 = vsel %vm699, %v698, %v696
    %702 = vrot.lane.b32.xlu0 %v670, 32
    %v703 = vpop.permute.xlu0 %702
    %704 = vrot.lane.b32.xlu0 %v671, 32
    %v705 = vpop.permute.xlu0 %704
    %v706 = vsel %vm699, %v703, %v705
    %v707 = vsel %vm699, %v705, %v703
    %v709 = vlaneseq
    %v710 = vshrl.u32 %v709, 7
    %v711 = vsub.s32 0, %v710
    %v712 = vrot.slane %v528, %v711
    %v713 = vlaneseq
    %v714 = vshrl.u32 %v713, 7
    %v715 = vsub.s32 1, %v714
    %v716 = vrot.slane %v528, %v715
    %v719 = vmul.f32 %v701, %v712
    %v720 = vmul.f32 %v700, %v716
    %v721 = vmul.f32 %v707, %v712
    %v722 = vmul.f32 %v706, %v716
    %723 = vrot.lane.b32.xlu0 %v655, 16
    %v724 = vpop.permute.xlu0 %723
    %725 = vrot.lane.b32.xlu0 %v656, 16
    %v726 = vpop.permute.xlu0 %725
    %vm727 = vcmp.lt.s32.totalorder %v138, 16
    %v728 = vsel %vm727, %v724, %v726
    %v729 = vsel %vm727, %v726, %v724
    %730 = vrot.lane.b32.xlu0 %v670, 16
    %v731 = vpop.permute.xlu0 %730
    %732 = vrot.lane.b32.xlu0 %v671, 16
    %v733 = vpop.permute.xlu0 %732
    %v734 = vsel %vm727, %v731, %v733
    %v735 = vsel %vm727, %v733, %v731
    %v737 = vlaneseq
    %v738 = vshrl.u32 %v737, 7
    %v739 = vsub.s32 0, %v738
    %v740 = vrot.slane %v530, %v739
    %v741 = vlaneseq
    %v742 = vshrl.u32 %v741, 7
    %v743 = vsub.s32 1, %v742
    %v744 = vrot.slane %v530, %v743
    %v747 = vmul.f32 %v729, %v740
    %v748 = vmul.f32 %v728, %v744
    %v749 = vmul.f32 %v735, %v740
    %v750 = vmul.f32 %v734, %v744
    %v752 = vlaneseq
    %v753 = vshrl.u32 %v752, 7
    %v754 = vsub.s32 0, %v753
    %v755 = vrot.slane %v532, %v754
    %v756 = vlaneseq
    %v757 = vshrl.u32 %v756, 7
    %v758 = vsub.s32 1, %v757
    %v759 = vrot.slane %v532, %v758
    %v762 = vmul.f32 %v494, %v755
    %v763 = vmul.f32 %v495, %v759
    %v764 = vmul.f32 %v496, %v755
    %v765 = vmul.f32 %v497, %v759
    %v766 = vmul.f32 %v504, %v755
    %v767 = vmul.f32 %v511, %v759
    %v768 = vmul.f32 %v518, %v755
    %v769 = vmul.f32 %v525, %v759
    %770 = vrot.lane.b32.xlu0 %v655, 112
    %v771 = vpop.permute.xlu0 %770
    %772 = vrot.lane.b32.xlu0 %v656, 112
    %v773 = vpop.permute.xlu0 %772
    %vm774 = vcmp.lt.s32.totalorder %v138, 112
    %v775 = vsel %vm774, %v771, %v773
    %v776 = vsel %vm774, %v773, %v771
    %777 = vrot.lane.b32.xlu0 %v670, 112
    %v778 = vpop.permute.xlu0 %777
    %779 = vrot.lane.b32.xlu0 %v671, 112
    %v780 = vpop.permute.xlu0 %779
    %v781 = vsel %vm774, %v778, %v780
    %v782 = vsel %vm774, %v780, %v778
    %v784 = vlaneseq
    %v785 = vshrl.u32 %v784, 7
    %v786 = vsub.s32 0, %v785
    %v787 = vrot.slane %v534, %v786
    %v788 = vlaneseq
    %v789 = vshrl.u32 %v788, 7
    %v790 = vsub.s32 1, %v789
    %v791 = vrot.slane %v534, %v790
    %v794 = vmul.f32 %v775, %v787
    %v795 = vmul.f32 %v776, %v791
    %v796 = vmul.f32 %v781, %v787
    %v797 = vmul.f32 %v782, %v791
    %798 = vrot.lane.b32.xlu0 %v655, 96
    %v799 = vpop.permute.xlu0 %798
    %800 = vrot.lane.b32.xlu0 %v656, 96
    %v801 = vpop.permute.xlu0 %800
    %vm802 = vcmp.lt.s32.totalorder %v138, 96
    %v803 = vsel %vm802, %v799, %v801
    %v804 = vsel %vm802, %v801, %v799
    %805 = vrot.lane.b32.xlu0 %v670, 96
    %v806 = vpop.permute.xlu0 %805
    %807 = vrot.lane.b32.xlu0 %v671, 96
    %v808 = vpop.permute.xlu0 %807
    %v809 = vsel %vm802, %v806, %v808
    %v810 = vsel %vm802, %v808, %v806
    %v812 = vlaneseq
    %v813 = vshrl.u32 %v812, 7
    %v814 = vsub.s32 0, %v813
    %v815 = vrot.slane %v536, %v814
    %v816 = vlaneseq
    %v817 = vshrl.u32 %v816, 7
    %v818 = vsub.s32 1, %v817
    %v819 = vrot.slane %v536, %v818
    %v822 = vmul.f32 %v803, %v815
    %v823 = vmul.f32 %v804, %v819
    %v824 = vmul.f32 %v809, %v815
    %v825 = vmul.f32 %v810, %v819
    %826 = vrot.lane.b32.xlu0 %v655, 80
    %v827 = vpop.permute.xlu0 %826
    %828 = vrot.lane.b32.xlu0 %v656, 80
    %v829 = vpop.permute.xlu0 %828
    %vm830 = vcmp.lt.s32.totalorder %v138, 80
    %v831 = vsel %vm830, %v827, %v829
    %v832 = vsel %vm830, %v829, %v827
    %833 = vrot.lane.b32.xlu0 %v670, 80
    %v834 = vpop.permute.xlu0 %833
    %835 = vrot.lane.b32.xlu0 %v671, 80
    %v836 = vpop.permute.xlu0 %835
    %v837 = vsel %vm830, %v834, %v836
    %v838 = vsel %vm830, %v836, %v834
    %v840 = vlaneseq
    %v841 = vshrl.u32 %v840, 7
    %v842 = vsub.s32 0, %v841
    %v843 = vrot.slane %v538, %v842
    %v844 = vlaneseq
    %v845 = vshrl.u32 %v844, 7
    %v846 = vsub.s32 1, %v845
    %v847 = vrot.slane %v538, %v846
    %v850 = vmul.f32 %v831, %v843
    %v851 = vmul.f32 %v832, %v847
    %v852 = vmul.f32 %v837, %v843
    %v853 = vmul.f32 %v838, %v847
    %v854 = vstv %s553
    %v855 = vmul.f32 %v854, %v691
    %v856 = vmul.f32 %v854, %v692
    %v857 = vstv %s602
    %v858 = vmul.f32 %v857, %v693
    %v859 = vmul.f32 %v857, %v694
    %v860 = vadd.f32 %v855, %v858
    %v861 = vadd.f32 %v856, %v859
    %v862 = vstv %s560
    %v863 = vmul.f32 %v862, %v719
    %v864 = vmul.f32 %v862, %v720
    %v865 = vstv %s609
    %v866 = vmul.f32 %v865, %v721
    %v867 = vmul.f32 %v865, %v722
    %v868 = vadd.f32 %v863, %v866
    %v869 = vadd.f32 %v864, %v867
    %v870 = vstv %s567
    %v871 = vmul.f32 %v870, %v747
    %v872 = vmul.f32 %v870, %v748
    %v873 = vstv %s616
    %v874 = vmul.f32 %v873, %v749
    %v875 = vmul.f32 %v873, %v750
    %v876 = vadd.f32 %v871, %v874
    %v877 = vadd.f32 %v872, %v875
    %v878 = vadd.f32 %v860, %v876
    %v879 = vadd.f32 %v861, %v877
    %v880 = vstv %s574
    %v881 = vmul.f32 %v880, %v762
    %v882 = vmul.f32 %v880, %v763
    %v883 = vmul.f32 %v880, %v764
    %v884 = vmul.f32 %v880, %v765
    %v885 = vstv %s623
    %v886 = vmul.f32 %v885, %v766
    %v887 = vmul.f32 %v885, %v767
    %v888 = vmul.f32 %v885, %v768
    %v889 = vmul.f32 %v885, %v769
    %v890 = vadd.f32 %v881, %v886
    %v891 = vadd.f32 %v882, %v887
    %v892 = vadd.f32 %v883, %v888
    %v893 = vadd.f32 %v884, %v889
    %v898 = vrot.slane %v892, 7
    %v899 = vsel %vm155, %v898, %v890
    %v900 = vrot.slane %v893, 7
    %v901 = vsel %vm155, %v900, %v891
    %v904 = vadd.f32 %v868, %v899
    %v905 = vadd.f32 %v869, %v901
    %v906 = vstv %s581
    %v907 = vmul.f32 %v906, %v794
    %v908 = vmul.f32 %v906, %v795
    %v909 = vstv %s630
    %v910 = vmul.f32 %v909, %v796
    %v911 = vmul.f32 %v909, %v797
    %v912 = vadd.f32 %v907, %v910
    %v913 = vadd.f32 %v908, %v911
    %v914 = vadd.f32 %v878, %v912
    %v915 = vadd.f32 %v879, %v913
    %v916 = vstv %s588
    %v917 = vmul.f32 %v916, %v822
    %v918 = vmul.f32 %v916, %v823
    %v919 = vstv %s637
    %v920 = vmul.f32 %v919, %v824
    %v921 = vmul.f32 %v919, %v825
    %v922 = vadd.f32 %v917, %v920
    %v923 = vadd.f32 %v918, %v921
    %v924 = vadd.f32 %v904, %v922
    %v925 = vadd.f32 %v905, %v923
    %v926 = vstv %s595
    %v927 = vmul.f32 %v926, %v850
    %v928 = vmul.f32 %v926, %v851
    %v929 = vstv %s644
    %v930 = vmul.f32 %v929, %v852
    %v931 = vmul.f32 %v929, %v853
    %v932 = vadd.f32 %v927, %v930
    %v933 = vadd.f32 %v928, %v931
    %v934 = vadd.f32 %v914, %v932
    %v935 = vadd.f32 %v915, %v933
    %v936 = vadd.f32 %v934, %v924
    %v937 = vadd.f32 %v935, %v925
    %938 = vrot.lane.b32.xlu0 %v936, 3
    %v939 = vpop.permute.xlu0 %938
    %940 = vrot.lane.b32.xlu0 %v937, 3
    %v941 = vpop.permute.xlu0 %940
    %vm942 = vcmp.lt.s32.totalorder %v138, 3
    %v943 = vsel %vm942, %v939, %v941
    %v944 = vsel %vm942, %v941, %v939
    %v946 = vlaneseq
    %v947 = vshrl.u32 %v946, 7
    %v948 = vsub.s32 0, %v947
    %v949 = vrot.slane %v540, %v948
    %v950 = vlaneseq
    %v951 = vshrl.u32 %v950, 7
    %v952 = vsub.s32 1, %v951
    %v953 = vrot.slane %v540, %v952
    %v956 = vmul.f32 %v944, %v949
    %v957 = vmul.f32 %v943, %v953
    %v958 = vstv %s554
    %v959 = vmul.f32 %v958, %v691
    %v960 = vmul.f32 %v958, %v692
    %v961 = vstv %s603
    %v962 = vmul.f32 %v961, %v693
    %v963 = vmul.f32 %v961, %v694
    %v964 = vadd.f32 %v959, %v962
    %v965 = vadd.f32 %v960, %v963
    %v966 = vstv %s561
    %v967 = vmul.f32 %v966, %v719
    %v968 = vmul.f32 %v966, %v720
    %v969 = vstv %s610
    %v970 = vmul.f32 %v969, %v721
    %v971 = vmul.f32 %v969, %v722
    %v972 = vadd.f32 %v967, %v970
    %v973 = vadd.f32 %v968, %v971
    %v974 = vstv %s568
    %v975 = vmul.f32 %v974, %v747
    %v976 = vmul.f32 %v974, %v748
    %v977 = vstv %s617
    %v978 = vmul.f32 %v977, %v749
    %v979 = vmul.f32 %v977, %v750
    %v980 = vadd.f32 %v975, %v978
    %v981 = vadd.f32 %v976, %v979
    %v982 = vadd.f32 %v964, %v980
    %v983 = vadd.f32 %v965, %v981
    %v984 = vstv %s575
    %v985 = vmul.f32 %v984, %v762
    %v986 = vmul.f32 %v984, %v763
    %v987 = vmul.f32 %v984, %v764
    %v988 = vmul.f32 %v984, %v765
    %v989 = vstv %s624
    %v990 = vmul.f32 %v989, %v766
    %v991 = vmul.f32 %v989, %v767
    %v992 = vmul.f32 %v989, %v768
    %v993 = vmul.f32 %v989, %v769
    %v994 = vadd.f32 %v985, %v990
    %v995 = vadd.f32 %v986, %v991
    %v996 = vadd.f32 %v987, %v992
    %v997 = vadd.f32 %v988, %v993
    %v1002 = vrot.slane %v996, 7
    %v1003 = vsel %vm155, %v1002, %v994
    %v1004 = vrot.slane %v997, 7
    %v1005 = vsel %vm155, %v1004, %v995
    %v1008 = vadd.f32 %v972, %v1003
    %v1009 = vadd.f32 %v973, %v1005
    %v1010 = vstv %s582
    %v1011 = vmul.f32 %v1010, %v794
    %v1012 = vmul.f32 %v1010, %v795
    %v1013 = vstv %s631
    %v1014 = vmul.f32 %v1013, %v796
    %v1015 = vmul.f32 %v1013, %v797
    %v1016 = vadd.f32 %v1011, %v1014
    %v1017 = vadd.f32 %v1012, %v1015
    %v1018 = vadd.f32 %v982, %v1016
    %v1019 = vadd.f32 %v983, %v1017
    %v1020 = vstv %s589
    %v1021 = vmul.f32 %v1020, %v822
    %v1022 = vmul.f32 %v1020, %v823
    %v1023 = vstv %s638
    %v1024 = vmul.f32 %v1023, %v824
    %v1025 = vmul.f32 %v1023, %v825
    %v1026 = vadd.f32 %v1021, %v1024
    %v1027 = vadd.f32 %v1022, %v1025
    %v1028 = vadd.f32 %v1008, %v1026
    %v1029 = vadd.f32 %v1009, %v1027
    %v1030 = vstv %s596
    %v1031 = vmul.f32 %v1030, %v850
    %v1032 = vmul.f32 %v1030, %v851
    %v1033 = vstv %s645
    %v1034 = vmul.f32 %v1033, %v852
    %v1035 = vmul.f32 %v1033, %v853
    %v1036 = vadd.f32 %v1031, %v1034
    %v1037 = vadd.f32 %v1032, %v1035
    %v1038 = vadd.f32 %v1018, %v1036
    %v1039 = vadd.f32 %v1019, %v1037
    %v1040 = vadd.f32 %v1038, %v1028
    %v1041 = vadd.f32 %v1039, %v1029
    %1042 = vrot.lane.b32.xlu0 %v1040, 2
    %v1043 = vpop.permute.xlu0 %1042
    %1044 = vrot.lane.b32.xlu0 %v1041, 2
    %v1045 = vpop.permute.xlu0 %1044
    %vm1046 = vcmp.lt.s32.totalorder %v138, 2
    %v1047 = vsel %vm1046, %v1043, %v1045
    %v1048 = vsel %vm1046, %v1045, %v1043
    %v1050 = vlaneseq
    %v1051 = vshrl.u32 %v1050, 7
    %v1052 = vsub.s32 0, %v1051
    %v1053 = vrot.slane %v542, %v1052
    %v1054 = vlaneseq
    %v1055 = vshrl.u32 %v1054, 7
    %v1056 = vsub.s32 1, %v1055
    %v1057 = vrot.slane %v542, %v1056
    %v1060 = vmul.f32 %v1048, %v1053
    %v1061 = vmul.f32 %v1047, %v1057
    %v1062 = vstv %s555
    %v1063 = vmul.f32 %v1062, %v691
    %v1064 = vmul.f32 %v1062, %v692
    %v1065 = vstv %s604
    %v1066 = vmul.f32 %v1065, %v693
    %v1067 = vmul.f32 %v1065, %v694
    %v1068 = vadd.f32 %v1063, %v1066
    %v1069 = vadd.f32 %v1064, %v1067
    %v1070 = vstv %s562
    %v1071 = vmul.f32 %v1070, %v719
    %v1072 = vmul.f32 %v1070, %v720
    %v1073 = vstv %s611
    %v1074 = vmul.f32 %v1073, %v721
    %v1075 = vmul.f32 %v1073, %v722
    %v1076 = vadd.f32 %v1071, %v1074
    %v1077 = vadd.f32 %v1072, %v1075
    %v1078 = vstv %s569
    %v1079 = vmul.f32 %v1078, %v747
    %v1080 = vmul.f32 %v1078, %v748
    %v1081 = vstv %s618
    %v1082 = vmul.f32 %v1081, %v749
    %v1083 = vmul.f32 %v1081, %v750
    %v1084 = vadd.f32 %v1079, %v1082
    %v1085 = vadd.f32 %v1080, %v1083
    %v1086 = vadd.f32 %v1068, %v1084
    %v1087 = vadd.f32 %v1069, %v1085
    %v1088 = vstv %s576
    %v1089 = vmul.f32 %v1088, %v762
    %v1090 = vmul.f32 %v1088, %v763
    %v1091 = vmul.f32 %v1088, %v764
    %v1092 = vmul.f32 %v1088, %v765
    %v1093 = vstv %s625
    %v1094 = vmul.f32 %v1093, %v766
    %v1095 = vmul.f32 %v1093, %v767
    %v1096 = vmul.f32 %v1093, %v768
    %v1097 = vmul.f32 %v1093, %v769
    %v1098 = vadd.f32 %v1089, %v1094
    %v1099 = vadd.f32 %v1090, %v1095
    %v1100 = vadd.f32 %v1091, %v1096
    %v1101 = vadd.f32 %v1092, %v1097
    %v1106 = vrot.slane %v1100, 7
    %v1107 = vsel %vm155, %v1106, %v1098
    %v1108 = vrot.slane %v1101, 7
    %v1109 = vsel %vm155, %v1108, %v1099
    %v1112 = vadd.f32 %v1076, %v1107
    %v1113 = vadd.f32 %v1077, %v1109
    %v1114 = vstv %s583
    %v1115 = vmul.f32 %v1114, %v794
    %v1116 = vmul.f32 %v1114, %v795
    %v1117 = vstv %s632
    %v1118 = vmul.f32 %v1117, %v796
    %v1119 = vmul.f32 %v1117, %v797
    %v1120 = vadd.f32 %v1115, %v1118
    %v1121 = vadd.f32 %v1116, %v1119
    %v1122 = vadd.f32 %v1086, %v1120
    %v1123 = vadd.f32 %v1087, %v1121
    %v1124 = vstv %s590
    %v1125 = vmul.f32 %v1124, %v822
    %v1126 = vmul.f32 %v1124, %v823
    %v1127 = vstv %s639
    %v1128 = vmul.f32 %v1127, %v824
    %v1129 = vmul.f32 %v1127, %v825
    %v1130 = vadd.f32 %v1125, %v1128
    %v1131 = vadd.f32 %v1126, %v1129
    %v1132 = vadd.f32 %v1112, %v1130
    %v1133 = vadd.f32 %v1113, %v1131
    %v1134 = vstv %s597
    %v1135 = vmul.f32 %v1134, %v850
    %v1136 = vmul.f32 %v1134, %v851
    %v1137 = vstv %s646
    %v1138 = vmul.f32 %v1137, %v852
    %v1139 = vmul.f32 %v1137, %v853
    %v1140 = vadd.f32 %v1135, %v1138
    %v1141 = vadd.f32 %v1136, %v1139
    %v1142 = vadd.f32 %v1122, %v1140
    %v1143 = vadd.f32 %v1123, %v1141
    %v1144 = vadd.f32 %v1142, %v1132
    %v1145 = vadd.f32 %v1143, %v1133
    %1146 = vrot.lane.b32.xlu0 %v1144, 1
    %v1147 = vpop.permute.xlu0 %1146
    %1148 = vrot.lane.b32.xlu0 %v1145, 1
    %v1149 = vpop.permute.xlu0 %1148
    %vm1150 = vcmp.lt.s32.totalorder %v138, 1
    %v1151 = vsel %vm1150, %v1147, %v1149
    %v1152 = vsel %vm1150, %v1149, %v1147
    %v1154 = vlaneseq
    %v1155 = vshrl.u32 %v1154, 7
    %v1156 = vsub.s32 0, %v1155
    %v1157 = vrot.slane %v544, %v1156
    %v1158 = vlaneseq
    %v1159 = vshrl.u32 %v1158, 7
    %v1160 = vsub.s32 1, %v1159
    %v1161 = vrot.slane %v544, %v1160
    %v1164 = vmul.f32 %v1152, %v1157
    %v1165 = vmul.f32 %v1151, %v1161
    %v1166 = vstv %s556
    %v1167 = vmul.f32 %v1166, %v691
    %v1168 = vmul.f32 %v1166, %v692
    %v1169 = vstv %s605
    %v1170 = vmul.f32 %v1169, %v693
    %v1171 = vmul.f32 %v1169, %v694
    %v1172 = vadd.f32 %v1167, %v1170
    %v1173 = vadd.f32 %v1168, %v1171
    %v1174 = vstv %s563
    %v1175 = vmul.f32 %v1174, %v719
    %v1176 = vmul.f32 %v1174, %v720
    %v1177 = vstv %s612
    %v1178 = vmul.f32 %v1177, %v721
    %v1179 = vmul.f32 %v1177, %v722
    %v1180 = vadd.f32 %v1175, %v1178
    %v1181 = vadd.f32 %v1176, %v1179
    %v1182 = vstv %s570
    %v1183 = vmul.f32 %v1182, %v747
    %v1184 = vmul.f32 %v1182, %v748
    %v1185 = vstv %s619
    %v1186 = vmul.f32 %v1185, %v749
    %v1187 = vmul.f32 %v1185, %v750
    %v1188 = vadd.f32 %v1183, %v1186
    %v1189 = vadd.f32 %v1184, %v1187
    %v1190 = vadd.f32 %v1172, %v1188
    %v1191 = vadd.f32 %v1173, %v1189
    %v1192 = vstv %s577
    %v1193 = vmul.f32 %v1192, %v762
    %v1194 = vmul.f32 %v1192, %v763
    %v1195 = vmul.f32 %v1192, %v764
    %v1196 = vmul.f32 %v1192, %v765
    %v1197 = vstv %s626
    %v1198 = vmul.f32 %v1197, %v766
    %v1199 = vmul.f32 %v1197, %v767
    %v1200 = vmul.f32 %v1197, %v768
    %v1201 = vmul.f32 %v1197, %v769
    %v1202 = vadd.f32 %v1193, %v1198
    %v1203 = vadd.f32 %v1194, %v1199
    %v1204 = vadd.f32 %v1195, %v1200
    %v1205 = vadd.f32 %v1196, %v1201
    %v1210 = vrot.slane %v1204, 7
    %v1211 = vsel %vm155, %v1210, %v1202
    %v1212 = vrot.slane %v1205, 7
    %v1213 = vsel %vm155, %v1212, %v1203
    %v1216 = vadd.f32 %v1180, %v1211
    %v1217 = vadd.f32 %v1181, %v1213
    %v1218 = vstv %s584
    %v1219 = vmul.f32 %v1218, %v794
    %v1220 = vmul.f32 %v1218, %v795
    %v1221 = vstv %s633
    %v1222 = vmul.f32 %v1221, %v796
    %v1223 = vmul.f32 %v1221, %v797
    %v1224 = vadd.f32 %v1219, %v1222
    %v1225 = vadd.f32 %v1220, %v1223
    %v1226 = vadd.f32 %v1190, %v1224
    %v1227 = vadd.f32 %v1191, %v1225
    %v1228 = vstv %s591
    %v1229 = vmul.f32 %v1228, %v822
    %v1230 = vmul.f32 %v1228, %v823
    %v1231 = vstv %s640
    %v1232 = vmul.f32 %v1231, %v824
    %v1233 = vmul.f32 %v1231, %v825
    %v1234 = vadd.f32 %v1229, %v1232
    %v1235 = vadd.f32 %v1230, %v1233
    %v1236 = vadd.f32 %v1216, %v1234
    %v1237 = vadd.f32 %v1217, %v1235
    %v1238 = vstv %s598
    %v1239 = vmul.f32 %v1238, %v850
    %v1240 = vmul.f32 %v1238, %v851
    %v1241 = vstv %s647
    %v1242 = vmul.f32 %v1241, %v852
    %v1243 = vmul.f32 %v1241, %v853
    %v1244 = vadd.f32 %v1239, %v1242
    %v1245 = vadd.f32 %v1240, %v1243
    %v1246 = vadd.f32 %v1226, %v1244
    %v1247 = vadd.f32 %v1227, %v1245
    %v1248 = vadd.f32 %v1246, %v1236
    %v1249 = vadd.f32 %v1247, %v1237
    %v1251 = vlaneseq
    %v1252 = vshrl.u32 %v1251, 7
    %v1253 = vsub.s32 0, %v1252
    %v1254 = vrot.slane %v546, %v1253
    %v1255 = vlaneseq
    %v1256 = vshrl.u32 %v1255, 7
    %v1257 = vsub.s32 1, %v1256
    %v1258 = vrot.slane %v546, %v1257
    %v1261 = vmul.f32 %v1248, %v1254
    %v1262 = vmul.f32 %v1249, %v1258
    %v1263 = vstv %s557
    %v1264 = vmul.f32 %v1263, %v691
    %v1265 = vmul.f32 %v1263, %v692
    %v1266 = vstv %s606
    %v1267 = vmul.f32 %v1266, %v693
    %v1268 = vmul.f32 %v1266, %v694
    %v1269 = vadd.f32 %v1264, %v1267
    %v1270 = vadd.f32 %v1265, %v1268
    %v1271 = vstv %s564
    %v1272 = vmul.f32 %v1271, %v719
    %v1273 = vmul.f32 %v1271, %v720
    %v1274 = vstv %s613
    %v1275 = vmul.f32 %v1274, %v721
    %v1276 = vmul.f32 %v1274, %v722
    %v1277 = vadd.f32 %v1272, %v1275
    %v1278 = vadd.f32 %v1273, %v1276
    %v1279 = vstv %s571
    %v1280 = vmul.f32 %v1279, %v747
    %v1281 = vmul.f32 %v1279, %v748
    %v1282 = vstv %s620
    %v1283 = vmul.f32 %v1282, %v749
    %v1284 = vmul.f32 %v1282, %v750
    %v1285 = vadd.f32 %v1280, %v1283
    %v1286 = vadd.f32 %v1281, %v1284
    %v1287 = vadd.f32 %v1269, %v1285
    %v1288 = vadd.f32 %v1270, %v1286
    %v1289 = vstv %s578
    %v1290 = vmul.f32 %v1289, %v762
    %v1291 = vmul.f32 %v1289, %v763
    %v1292 = vmul.f32 %v1289, %v764
    %v1293 = vmul.f32 %v1289, %v765
    %v1294 = vstv %s627
    %v1295 = vmul.f32 %v1294, %v766
    %v1296 = vmul.f32 %v1294, %v767
    %v1297 = vmul.f32 %v1294, %v768
    %v1298 = vmul.f32 %v1294, %v769
    %v1299 = vadd.f32 %v1290, %v1295
    %v1300 = vadd.f32 %v1291, %v1296
    %v1301 = vadd.f32 %v1292, %v1297
    %v1302 = vadd.f32 %v1293, %v1298
    %v1307 = vrot.slane %v1301, 7
    %v1308 = vsel %vm155, %v1307, %v1299
    %v1309 = vrot.slane %v1302, 7
    %v1310 = vsel %vm155, %v1309, %v1300
    %v1313 = vadd.f32 %v1277, %v1308
    %v1314 = vadd.f32 %v1278, %v1310
    %v1315 = vstv %s585
    %v1316 = vmul.f32 %v1315, %v794
    %v1317 = vmul.f32 %v1315, %v795
    %v1318 = vstv %s634
    %v1319 = vmul.f32 %v1318, %v796
    %v1320 = vmul.f32 %v1318, %v797
    %v1321 = vadd.f32 %v1316, %v1319
    %v1322 = vadd.f32 %v1317, %v1320
    %v1323 = vadd.f32 %v1287, %v1321
    %v1324 = vadd.f32 %v1288, %v1322
    %v1325 = vstv %s592
    %v1326 = vmul.f32 %v1325, %v822
    %v1327 = vmul.f32 %v1325, %v823
    %v1328 = vstv %s641
    %v1329 = vmul.f32 %v1328, %v824
    %v1330 = vmul.f32 %v1328, %v825
    %v1331 = vadd.f32 %v1326, %v1329
    %v1332 = vadd.f32 %v1327, %v1330
    %v1333 = vadd.f32 %v1313, %v1331
    %v1334 = vadd.f32 %v1314, %v1332
    %v1335 = vstv %s599
    %v1336 = vmul.f32 %v1335, %v850
    %v1337 = vmul.f32 %v1335, %v851
    %v1338 = vstv %s648
    %v1339 = vmul.f32 %v1338, %v852
    %v1340 = vmul.f32 %v1338, %v853
    %v1341 = vadd.f32 %v1336, %v1339
    %v1342 = vadd.f32 %v1337, %v1340
    %v1343 = vadd.f32 %v1323, %v1341
    %v1344 = vadd.f32 %v1324, %v1342
    %v1345 = vadd.f32 %v1343, %v1333
    %v1346 = vadd.f32 %v1344, %v1334
    %1347 = vrot.lane.b32.xlu0 %v1345, 127
    %v1348 = vpop.permute.xlu0 %1347
    %1349 = vrot.lane.b32.xlu0 %v1346, 127
    %v1350 = vpop.permute.xlu0 %1349
    %vm1351 = vcmp.lt.s32.totalorder %v138, 127
    %v1352 = vsel %vm1351, %v1348, %v1350
    %v1353 = vsel %vm1351, %v1350, %v1348
    %v1355 = vlaneseq
    %v1356 = vshrl.u32 %v1355, 7
    %v1357 = vsub.s32 0, %v1356
    %v1358 = vrot.slane %v548, %v1357
    %v1359 = vlaneseq
    %v1360 = vshrl.u32 %v1359, 7
    %v1361 = vsub.s32 1, %v1360
    %v1362 = vrot.slane %v548, %v1361
    %v1365 = vmul.f32 %v1352, %v1358
    %v1366 = vmul.f32 %v1353, %v1362
    %v1367 = vstv %s558
    %v1368 = vmul.f32 %v1367, %v691
    %v1369 = vmul.f32 %v1367, %v692
    %v1370 = vstv %s607
    %v1371 = vmul.f32 %v1370, %v693
    %v1372 = vmul.f32 %v1370, %v694
    %v1373 = vadd.f32 %v1368, %v1371
    %v1374 = vadd.f32 %v1369, %v1372
    %v1375 = vstv %s565
    %v1376 = vmul.f32 %v1375, %v719
    %v1377 = vmul.f32 %v1375, %v720
    %v1378 = vstv %s614
    %v1379 = vmul.f32 %v1378, %v721
    %v1380 = vmul.f32 %v1378, %v722
    %v1381 = vadd.f32 %v1376, %v1379
    %v1382 = vadd.f32 %v1377, %v1380
    %v1383 = vstv %s572
    %v1384 = vmul.f32 %v1383, %v747
    %v1385 = vmul.f32 %v1383, %v748
    %v1386 = vstv %s621
    %v1387 = vmul.f32 %v1386, %v749
    %v1388 = vmul.f32 %v1386, %v750
    %v1389 = vadd.f32 %v1384, %v1387
    %v1390 = vadd.f32 %v1385, %v1388
    %v1391 = vadd.f32 %v1373, %v1389
    %v1392 = vadd.f32 %v1374, %v1390
    %v1393 = vstv %s579
    %v1394 = vmul.f32 %v1393, %v762
    %v1395 = vmul.f32 %v1393, %v763
    %v1396 = vmul.f32 %v1393, %v764
    %v1397 = vmul.f32 %v1393, %v765
    %v1398 = vstv %s628
    %v1399 = vmul.f32 %v1398, %v766
    %v1400 = vmul.f32 %v1398, %v767
    %v1401 = vmul.f32 %v1398, %v768
    %v1402 = vmul.f32 %v1398, %v769
    %v1403 = vadd.f32 %v1394, %v1399
    %v1404 = vadd.f32 %v1395, %v1400
    %v1405 = vadd.f32 %v1396, %v1401
    %v1406 = vadd.f32 %v1397, %v1402
    %v1411 = vrot.slane %v1405, 7
    %v1412 = vsel %vm155, %v1411, %v1403
    %v1413 = vrot.slane %v1406, 7
    %v1414 = vsel %vm155, %v1413, %v1404
    %v1417 = vadd.f32 %v1381, %v1412
    %v1418 = vadd.f32 %v1382, %v1414
    %v1419 = vstv %s586
    %v1420 = vmul.f32 %v1419, %v794
    %v1421 = vmul.f32 %v1419, %v795
    %v1422 = vstv %s635
    %v1423 = vmul.f32 %v1422, %v796
    %v1424 = vmul.f32 %v1422, %v797
    %v1425 = vadd.f32 %v1420, %v1423
    %v1426 = vadd.f32 %v1421, %v1424
    %v1427 = vadd.f32 %v1391, %v1425
    %v1428 = vadd.f32 %v1392, %v1426
    %v1429 = vstv %s593
    %v1430 = vmul.f32 %v1429, %v822
    %v1431 = vmul.f32 %v1429, %v823
    %v1432 = vstv %s642
    %v1433 = vmul.f32 %v1432, %v824
    %v1434 = vmul.f32 %v1432, %v825
    %v1435 = vadd.f32 %v1430, %v1433
    %v1436 = vadd.f32 %v1431, %v1434
    %v1437 = vadd.f32 %v1417, %v1435
    %v1438 = vadd.f32 %v1418, %v1436
    %v1439 = vstv %s600
    %v1440 = vmul.f32 %v1439, %v850
    %v1441 = vmul.f32 %v1439, %v851
    %v1442 = vstv %s649
    %v1443 = vmul.f32 %v1442, %v852
    %v1444 = vmul.f32 %v1442, %v853
    %v1445 = vadd.f32 %v1440, %v1443
    %v1446 = vadd.f32 %v1441, %v1444
    %v1447 = vadd.f32 %v1427, %v1445
    %v1448 = vadd.f32 %v1428, %v1446
    %v1449 = vadd.f32 %v1447, %v1437
    %v1450 = vadd.f32 %v1448, %v1438
    %1451 = vrot.lane.b32.xlu0 %v1449, 126
    %v1452 = vpop.permute.xlu0 %1451
    %1453 = vrot.lane.b32.xlu0 %v1450, 126
    %v1454 = vpop.permute.xlu0 %1453
    %vm1455 = vcmp.lt.s32.totalorder %v138, 126
    %v1456 = vsel %vm1455, %v1452, %v1454
    %v1457 = vsel %vm1455, %v1454, %v1452
    %v1459 = vlaneseq
    %v1460 = vshrl.u32 %v1459, 7
    %v1461 = vsub.s32 0, %v1460
    %v1462 = vrot.slane %v550, %v1461
    %v1463 = vlaneseq
    %v1464 = vshrl.u32 %v1463, 7
    %v1465 = vsub.s32 1, %v1464
    %v1466 = vrot.slane %v550, %v1465
    %v1469 = vmul.f32 %v1456, %v1462
    %v1470 = vmul.f32 %v1457, %v1466
    %v1471 = vstv %s559
    %v1472 = vmul.f32 %v1471, %v691
    %v1473 = vmul.f32 %v1471, %v692
    %v1474 = vstv %s608
    %v1475 = vmul.f32 %v1474, %v693
    %v1476 = vmul.f32 %v1474, %v694
    %v1477 = vadd.f32 %v1472, %v1475
    %v1478 = vadd.f32 %v1473, %v1476
    %v1479 = vstv %s566
    %v1480 = vmul.f32 %v1479, %v719
    %v1481 = vmul.f32 %v1479, %v720
    %v1482 = vstv %s615
    %v1483 = vmul.f32 %v1482, %v721
    %v1484 = vmul.f32 %v1482, %v722
    %v1485 = vadd.f32 %v1480, %v1483
    %v1486 = vadd.f32 %v1481, %v1484
    %v1487 = vstv %s573
    %v1488 = vmul.f32 %v1487, %v747
    %v1489 = vmul.f32 %v1487, %v748
    %v1490 = vstv %s622
    %v1491 = vmul.f32 %v1490, %v749
    %v1492 = vmul.f32 %v1490, %v750
    %v1493 = vadd.f32 %v1488, %v1491
    %v1494 = vadd.f32 %v1489, %v1492
    %v1495 = vadd.f32 %v1477, %v1493
    %v1496 = vadd.f32 %v1478, %v1494
    %v1497 = vstv %s580
    %v1498 = vmul.f32 %v1497, %v762
    %v1499 = vmul.f32 %v1497, %v763
    %v1500 = vmul.f32 %v1497, %v764
    %v1501 = vmul.f32 %v1497, %v765
    %v1502 = vstv %s629
    %v1503 = vmul.f32 %v1502, %v766
    %v1504 = vmul.f32 %v1502, %v767
    %v1505 = vmul.f32 %v1502, %v768
    %v1506 = vmul.f32 %v1502, %v769
    %v1507 = vadd.f32 %v1498, %v1503
    %v1508 = vadd.f32 %v1499, %v1504
    %v1509 = vadd.f32 %v1500, %v1505
    %v1510 = vadd.f32 %v1501, %v1506
    %v1515 = vrot.slane %v1509, 7
    %v1516 = vsel %vm155, %v1515, %v1507
    %v1517 = vrot.slane %v1510, 7
    %v1518 = vsel %vm155, %v1517, %v1508
    %v1521 = vadd.f32 %v1485, %v1516
    %v1522 = vadd.f32 %v1486, %v1518
    %v1523 = vstv %s587
    %v1524 = vmul.f32 %v1523, %v794
    %v1525 = vmul.f32 %v1523, %v795
    %v1526 = vstv %s636
    %v1527 = vmul.f32 %v1526, %v796
    %v1528 = vmul.f32 %v1526, %v797
    %v1529 = vadd.f32 %v1524, %v1527
    %v1530 = vadd.f32 %v1525, %v1528
    %v1531 = vadd.f32 %v1495, %v1529
    %v1532 = vadd.f32 %v1496, %v1530
    %v1533 = vstv %s594
    %v1534 = vmul.f32 %v1533, %v822
    %v1535 = vmul.f32 %v1533, %v823
    %v1536 = vstv %s643
    %v1537 = vmul.f32 %v1536, %v824
    %v1538 = vmul.f32 %v1536, %v825
    %v1539 = vadd.f32 %v1534, %v1537
    %v1540 = vadd.f32 %v1535, %v1538
    %v1541 = vadd.f32 %v1521, %v1539
    %v1542 = vadd.f32 %v1522, %v1540
    %v1543 = vstv %s601
    %v1544 = vmul.f32 %v1543, %v850
    %v1545 = vmul.f32 %v1543, %v851
    %v1546 = vstv %s650
    %v1547 = vmul.f32 %v1546, %v852
    %v1548 = vmul.f32 %v1546, %v853
    %v1549 = vadd.f32 %v1544, %v1547
    %v1550 = vadd.f32 %v1545, %v1548
    %v1551 = vadd.f32 %v1531, %v1549
    %v1552 = vadd.f32 %v1532, %v1550
    %v1553 = vadd.f32 %v1551, %v1541
    %v1554 = vadd.f32 %v1552, %v1542
    %1555 = vrot.lane.b32.xlu0 %v1553, 125
    %v1556 = vpop.permute.xlu0 %1555
    %1557 = vrot.lane.b32.xlu0 %v1554, 125
    %v1558 = vpop.permute.xlu0 %1557
    %vm1559 = vcmp.lt.s32.totalorder %v138, 125
    %v1560 = vsel %vm1559, %v1556, %v1558
    %v1561 = vsel %vm1559, %v1558, %v1556
    %v1563 = vlaneseq
    %v1564 = vshrl.u32 %v1563, 7
    %v1565 = vsub.s32 0, %v1564
    %v1566 = vrot.slane %v552, %v1565
    %v1567 = vlaneseq
    %v1568 = vshrl.u32 %v1567, 7
    %v1569 = vsub.s32 1, %v1568
    %v1570 = vrot.slane %v552, %v1569
    %v1573 = vmul.f32 %v1560, %v1566
    %v1574 = vmul.f32 %v1561, %v1570
    %v1575 = vadd.f32 %v956, %v1060
    %v1576 = vadd.f32 %v957, %v1061
    %v1577 = vadd.f32 %v1575, %v1164
    %v1578 = vadd.f32 %v1576, %v1165
    %v1579 = vadd.f32 %v1577, %v1261
    %v1580 = vadd.f32 %v1578, %v1262
    %v1581 = vadd.f32 %v1579, %v1365
    %v1582 = vadd.f32 %v1580, %v1366
    %v1583 = vadd.f32 %v1581, %v1469
    %v1584 = vadd.f32 %v1582, %v1470
    %v1585 = vadd.f32 %v1583, %v1573
    %v1586 = vadd.f32 %v1584, %v1574
    %s1587 = sld [smem:[#allocation2]]
    %v1588 = vstv %s1587
    %v1589 = vadd.f32 %v1585, %v1588
    %v1590 = vadd.f32 %v1586, %v1588
    %v1591 = vxor.u32 %v1589, 2147483648
    %v1592 = vxor.u32 %v1590, 2147483648
    %v1593 = vmul.f32 %v1591, 1.442695
    %v1594 = vpow.pop %v1593
    %v1595 = vmul.f32 %v1592, 1.442695
    %v1596 = vpow.pop %v1595
    %v1597 = vadd.f32 %v1594, 1.0
    %v1598 = vadd.f32 %v1596, 1.0
    %v1599 = vrcp.pop %v1597
    %v1600 = vmul.f32 1.0, %v1599
    %v1601 = vrcp.pop %v1598
    %v1602 = vmul.f32 1.0, %v1601
    %v1605 = vcombine.low %v1600, %v1602
    %v1607 = vunpack.c.l.s4 1966171168
    %v1608 = vunpack.c.0.s8 %v1607
    %v1609 = vlaneseq
    %v1610 = vshrl.u32 %v1609, 7
    %v1611 = vsub.s32 %v1608, %v1610
    %v1612 = vrot.slane %v1605, %v1611
    %v1613 = vcombine.high %v1612, %v1612
    %v1615 = vunpack.c.l.s4 1966171168
    %v1616 = vunpack.c.0.s8 %v1615
    %v1617 = vlaneseq
    %v1618 = vshrl.u32 %v1617, 7
    %v1619 = vsub.s32 %v1616, %v1618
    %v1620 = vrot.slane %v1612, %v1619
    %v1622 = vunpack.c.l.s4 1966171168
    %v1623 = vunpack.c.0.s8 %v1622
    %v1624 = vlaneseq
    %v1625 = vshrl.u32 %v1624, 7
    %v1626 = vsub.s32 %v1623, %v1625
    %v1627 = vrot.slane %v1613, %v1626
    %v1628 = vlaneseq
    %v1629 = vshrl.u32 %v1628, 7
    %v1630 = vsub.s32 0, %v1629
    %v1631 = vrot.slane %v1620, %v1630
    %v1632 = vlaneseq
    %v1633 = vshrl.u32 %v1632, 7
    %v1634 = vsub.s32 1, %v1633
    %v1635 = vrot.slane %v1620, %v1634
    %v1636 = vlaneseq
    %v1637 = vshrl.u32 %v1636, 7
    %v1638 = vsub.s32 0, %v1637
    %v1639 = vrot.slane %v1627, %v1638
    %v1640 = vlaneseq
    %v1641 = vshrl.u32 %v1640, 7
    %v1642 = vsub.s32 1, %v1641
    %v1643 = vrot.slane %v1627, %v1642
    %v1644 = vcombine.low %v1631, %v1635
    %v1645 = vcombine.low %v1639, %v1643
    %v1648 = vmul.f32 %v457, %v1644
    %v1649 = vmul.f32 %v458, %v1645
    %1650 = vst [vmem:[#allocation10] sm:$0xff] %v1648
    %1651 = vst [vmem:[#allocation10 + $0x8] sm:$0xff] %v1649
    // Predicated region
    $region38: #{tpu_custom_call.1} parent=1 // pred_check
      _
    $region39: #{tpu_custom_call.1} parent=1 // pred_check_branch
      %1653 = sbr.rel (0) target = $region41
    $region40: #{tpu_custom_call.1} parent=1 // pred_region
      %s1655 = ssub.s32 256, 256
      %1656 = vsyncadd [#allocation5], %s1655
      %s1657 = sshll.u32 [#allocation10], 4
      %s1658 = int_to_ptr.vmem [resolvable:$true] %s1657
      %1663 = dma.vmem_to_hbm [thread:$0]  %s1658, 256, %s6, [#allocation5], 128, 128, 8
    $region41: #{tpu_custom_call.1} parent=1 // pred_fallthru
      _
    // Predicated region
    $region42: #{tpu_custom_call.1} parent=1 // pred_check
      _
    $region43: #{tpu_custom_call.1} parent=1 // pred_check_branch
      %1665 = sbr.rel (0) target = $region45
    $region44: #{tpu_custom_call.1} parent=1 // pred_region
      %1666 = dma.done [#allocation5], 256
    $region45: #{tpu_custom_call.1} parent=1 // pred_fallthru
      _
    %1667 = vsyncpa [#allocation4], 1
    %1668 = vsyncpa [#allocation8], 1
    %1669 = vsyncpa [#allocation5], 1
    %1670 = vsyncpa [#allocation6], 1

</llo_original>
